<compile_context>
chip_gen: v5e
topology: v5e:2x2
jax: 0.10.0
libtpu: 0.0.40
codegen_flags: <defaults>
</compile_context>

<pallas_src>
import functools

import jax
import jax.numpy as jnp
from jax.experimental import pallas as pl
from jax.experimental.pallas import tpu as pltpu

EPS = 1e-5


# ----------------------------------------------------------------------------
# Fused Pallas kernel: in-kernel im2col + conv1 + expand + depthwise + project
# ----------------------------------------------------------------------------
def _fused_mbv2_kernel(x_ref, w1_ref, b1_ref, we_ref, be_ref, wdw_ref, bdw_ref,
                       wps_ref, bc_ref, o_ref, patch_ref,
                       *, G, Ho, Wo, Cin, Cexp, K1p):
    """Activations live as (rows = images*Ho on sublanes, Wo*channels on lanes)."""
    M = G * Ho
    WC = Wo * Cexp
    WCin = Wo * Cin
    Hp2 = 2 * (Ho + 1)                    # rows per image in the phase-split input

    # ---- in-kernel im2col for conv1 (3x3, stride 2, pad 1) ----
    # Input row phases per image: rows [0, Ho+1) hold the even padded rows,
    # rows [Ho+1, 2*(Ho+1)) the odd rows.  Column phases: lanes
    # [0, (Wo+1)*Cin) hold even padded columns, the rest the odd columns.
    # Output row ho / tap dh needs padded input row 2*ho+dh (columns likewise),
    # which makes every tap a contiguous (Ho, Wo*Cin) slice.
    row_start = (0, Ho + 1, 1)            # dh = 0, 1, 2
    col_start = (0, (Wo + 1) * Cin, Cin)  # dw = 0, 1, 2
    patch_ref[...] = jnp.zeros_like(patch_ref)      # also zeroes the K-pad tail
    for dh in range(3):
        for dw in range(3):
            t = dh * 3 + dw
            for g in range(G):
                patch_ref[pl.ds(g * Ho, Ho), pl.ds(t * WCin, WCin)] = (
                    x_ref[pl.ds(g * Hp2 + row_start[dh], Ho),
                          pl.ds(col_start[dw], WCin)])
    patch = patch_ref[...].astype(jnp.bfloat16)     # (M, K1p)

    # ---- conv1: im2col matmul (BN folded into weights) + ReLU6 ----
    y1 = jnp.dot(patch, w1_ref[...],
                 preferred_element_type=jnp.float32) + b1_ref[...]
    y1 = jnp.minimum(jnp.maximum(y1, 0.0), 6.0)     # (M, Wo*Cexp) f32
    y1b = y1.astype(jnp.bfloat16)

    # ---- bottleneck expand 1x1 (block-diag weight) + BN + ReLU6 ----
    y2 = jnp.dot(y1b, we_ref[...],
                 preferred_element_type=jnp.float32) + be_ref[...]
    y2 = jnp.minimum(jnp.maximum(y2, 0.0), 6.0)     # (M, Wo*Cexp) f32

    # ---- depthwise 3x3, stride 1, pad 1 (+BN+ReLU), roll-based taps ----
    # Rows are packed (image, ho); masks use row % Ho so the sublane roll
    # never leaks across images.
    rmod = jax.lax.broadcasted_iota(jnp.int32, (M, WC), 0) % Ho
    acc = jnp.zeros((M, WC), jnp.float32)
    for kh in range(3):
        if kh == 1:
            xh = y2
        else:
            xh = pltpu.roll(y2, shift=(1 - kh) % M, axis=0)
            if kh == 0:
                xh = jnp.where(rmod >= 1, xh, 0.0)        # top padding row
            else:
                xh = jnp.where(rmod < Ho - 1, xh, 0.0)    # bottom padding row
        for kw in range(3):
            t = kh * 3 + kw
            if kw == 1:
                xw = xh
            else:
                # W-boundary wrap positions are pre-zeroed in wdw_ref.
                xw = pltpu.roll(xh, shift=((1 - kw) * Cexp) % WC, axis=1)
            acc = acc + xw * wdw_ref[t]
    y3 = jnp.maximum(acc + bdw_ref[...], 0.0)       # plain ReLU per the spec

    # ---- project 1x1 + BN fused with the 1x1 shortcut on y1: one MXU dot ----
    cat = jnp.concatenate([y3.astype(jnp.bfloat16), y1b], axis=1)   # (M, 2*WC)
    o_ref[...] = (jnp.dot(cat, wps_ref[...],
                          preferred_element_type=jnp.float32) + bc_ref[...])


def fused_mbv2_block(x, w1bd, b1, webd, be, wdw, bdw, wps, bc,
                     *, n_groups, G, Ho, Wo, Cin, Cexp, Cout, K1p):
    M = G * Ho
    WC = Wo * Cexp
    WO = Wo * Cout
    Hp2 = 2 * (Ho + 1)
    Lx = 2 * (Wo + 1) * Cin
    const2 = lambda g: (0, 0)
    const3 = lambda g: (0, 0, 0)
    kernel = functools.partial(_fused_mbv2_kernel, G=G, Ho=Ho, Wo=Wo,
                               Cin=Cin, Cexp=Cexp, K1p=K1p)
    # TODO(synk): mark constant-index weight specs pipeline_mode=pl.Buffered(1)
    # once the grid has >1 step and Wo grows (saves the redundant double buffer).
    return pl.pallas_call(
        kernel,
        out_shape=jax.ShapeDtypeStruct((n_groups, M, WO), jnp.float32),
        grid=(n_groups,),
        in_specs=[
            pl.BlockSpec((None, G * Hp2, Lx), lambda g: (g, 0, 0)),  # phase-split x
            pl.BlockSpec((K1p, WC), const2),      # conv1 tap-stacked block-diag W (bf16)
            pl.BlockSpec((1, WC), const2),        # conv1 bias (f32)
            pl.BlockSpec((WC, WC), const2),       # expand block-diag W (bf16)
            pl.BlockSpec((1, WC), const2),        # expand bias (f32)
            pl.BlockSpec((9, M, WC), const3),     # depthwise tap weights (f32)
            pl.BlockSpec((1, WC), const2),        # depthwise bias (f32)
            pl.BlockSpec((2 * WC, WO), const2),   # [project; shortcut] W (bf16)
            pl.BlockSpec((1, WO), const2),        # project+shortcut bias (f32)
        ],
        out_specs=pl.BlockSpec((None, M, WO), lambda g: (g, 0, 0)),
        scratch_shapes=[pltpu.VMEM((M, K1p), jnp.float32)],      # im2col patch
        compiler_params=pltpu.CompilerParams(
            dimension_semantics=("parallel",),
            vmem_limit_bytes=16 * 1024 * 1024),
    )(x, w1bd, b1, webd, be, wdw, bdw, wps, bc)


# ----------------------------------------------------------------------------
# Parameter setup (deterministic, synthetic)
# ----------------------------------------------------------------------------
def init_conv(key, cout, cin, kh, kw):
    k_w, k_b = jax.random.split(key)
    fan_in = cin * kh * kw
    w = jax.random.normal(k_w, (cout, cin, kh, kw), jnp.float32) / jnp.sqrt(float(fan_in))
    b = 0.01 * jax.random.normal(k_b, (cout,), jnp.float32)
    return w, b


def init_bn(key, c):
    k1, k2, k3, k4 = jax.random.split(key, 4)
    gamma = 1.0 + 0.1 * jax.random.normal(k1, (c,), jnp.float32)
    beta = 0.1 * jax.random.normal(k2, (c,), jnp.float32)
    mean = 0.1 * jax.random.normal(k3, (c,), jnp.float32)
    var = 0.5 + jax.random.uniform(k4, (c,), jnp.float32)
    return gamma, beta, mean, var


def make_params(in_channels, key):
    ks = jax.random.split(key, 12)
    p = {}
    w, b = init_conv(ks[0], 32, in_channels, 3, 3)
    p["conv1"] = {"w": w, "b": b, "bn": init_bn(ks[1], 32)}
    w, b = init_conv(ks[2], 32, 32, 1, 1)
    p["exp"] = {"w": w, "b": b, "bn": init_bn(ks[3], 32)}
    w, b = init_conv(ks[4], 32, 1, 3, 3)          # depthwise: (C, 1, 3, 3)
    p["dw"] = {"w": w, "b": b, "bn": init_bn(ks[5], 32)}
    w, b = init_conv(ks[6], 16, 32, 1, 1)
    p["proj"] = {"w": w, "b": b, "bn": init_bn(ks[7], 16)}
    w, b = init_conv(ks[8], 16, 32, 1, 1)         # padd_conv shortcut (no BN)
    p["short"] = {"w": w, "b": b}
    return p


# ----------------------------------------------------------------------------
# Wrapper: BN folding, block-diagonal weight construction, phase-split input
# ----------------------------------------------------------------------------
def _fold_bn(w2d, conv_b, bn):
    gamma, beta, mean, var = bn
    s = gamma / jnp.sqrt(var + EPS)
    return w2d * s[None, :], (conv_b - mean) * s + beta


def _block_diag_over_w(w, wo):
    """(cin, cout) -> (wo*cin, wo*cout) block-diagonal (per-pixel 1x1 conv)."""
    cin, cout = w.shape
    eye = jnp.eye(wo, dtype=w.dtype)
    bd = eye[:, None, :, None] * w[None, :, None, :]
    return bd.reshape(wo * cin, wo * cout)


def mobilenetv2_forward(x_nchw, params):
    N, Cin, Hin, Win = x_nchw.shape
    assert Hin % 2 == 0 and Win % 2 == 0, "phase-split conv1 path expects even H/W"
    Ho, Wo = Hin // 2, Win // 2
    Cexp, Cout = 32, 16
    WC, WO = Wo * Cexp, Wo * Cout
    K1 = 9 * Wo * Cin
    K1p = ((K1 + 127) // 128) * 128

    # Batch grouping: one block packs the whole batch into the matmul M
    # dimension; split into two groups (one per v7x TensorCore) only when each
    # group still carries plenty of sublane rows.
    n_groups = 2 if (N % 2 == 0 and (N // 2) * Ho >= 64) else 1
    G = N // n_groups
    M = G * Ho

    # ---- input: NCHW -> NHWC, pad by 1, split rows/cols into even/odd phase
    #      blocks so the stride-2 conv1 taps become contiguous in-kernel slices.
    x = jnp.transpose(x_nchw, (0, 2, 3, 1))
    x = jnp.pad(x, ((0, 0), (1, 1), (1, 1), (0, 0)))
    Hp, Wp = Hin + 2, Win + 2
    x = x.reshape(N, Hp // 2, 2, Wp // 2, 2, Cin)
    x = jnp.transpose(x, (0, 2, 1, 4, 3, 5))      # (N, rphase, Hp/2, cphase, Wp/2, Cin)
    x = x.reshape(n_groups, G * Hp, 2 * (Wp // 2) * Cin)

    # ---- conv1: fold BN, per-tap block-diag over Wo, stack taps along K ----
    g1, bt1, m1, v1 = params["conv1"]["bn"]
    s1 = g1 / jnp.sqrt(v1 + EPS)
    w1 = jnp.transpose(params["conv1"]["w"], (2, 3, 1, 0)) * s1   # (3,3,Cin,Cexp)
    w1 = w1.reshape(9, Cin, Cexp)
    w1bd = jnp.concatenate([_block_diag_over_w(w1[t], Wo) for t in range(9)], axis=0)
    w1bd = jnp.pad(w1bd, ((0, K1p - K1), (0, 0))).astype(jnp.bfloat16)   # (K1p, WC)
    b1 = jnp.tile((params["conv1"]["b"] - m1) * s1 + bt1, (Wo,)).reshape(1, WC)

    # ---- expand 1x1 ----
    we = jnp.transpose(params["exp"]["w"].reshape(Cexp, Cexp), (1, 0))
    wef, bef = _fold_bn(we, params["exp"]["b"], params["exp"]["bn"])
    webd = _block_diag_over_w(wef, Wo).astype(jnp.bfloat16)              # (WC, WC)
    be = jnp.tile(bef, (Wo,)).reshape(1, WC)

    # ---- depthwise 3x3: fold BN, bake W-boundary zeros, pre-tile over rows ----
    wdw = jnp.transpose(params["dw"]["w"].reshape(Cexp, 3, 3), (1, 2, 0)).reshape(9, Cexp)
    gd, btd, md, vd = params["dw"]["bn"]
    sd = gd / jnp.sqrt(vd + EPS)
    wdw = wdw * sd[None, :]
    bdwf = (params["dw"]["b"] - md) * sd + btd
    wdw_lane = jnp.tile(wdw[:, None, :], (1, Wo, 1))                     # (9, Wo, Cexp)
    kw_idx = jnp.arange(9) % 3
    wcol = jnp.arange(Wo)
    keep = ~((kw_idx == 0)[:, None] & (wcol == 0)[None, :])
    keep &= ~((kw_idx == 2)[:, None] & (wcol == Wo - 1)[None, :])
    wdw_lane = (wdw_lane * keep[:, :, None].astype(jnp.float32)).reshape(9, 1, WC)
    wdw_tiled = jnp.tile(wdw_lane, (1, M, 1))                            # (9, M, WC)
    bdw = jnp.tile(bdwf, (Wo,)).reshape(1, WC)

    # ---- project 1x1 + BN stacked with the 1x1 shortcut: single weight ----
    wp = jnp.transpose(params["proj"]["w"].reshape(Cout, Cexp), (1, 0))
    wpf, bpf = _fold_bn(wp, params["proj"]["b"], params["proj"]["bn"])
    wsc = jnp.transpose(params["short"]["w"].reshape(Cout, Cexp), (1, 0))
    wps = jnp.concatenate([_block_diag_over_w(wpf, Wo),
                           _block_diag_over_w(wsc, Wo)], axis=0).astype(jnp.bfloat16)
    bc = jnp.tile(bpf + params["short"]["b"], (Wo,)).reshape(1, WO)

    # TODO(synk): the Wo-replicated block-diagonal 1x1 weights waste Wo x FLOPs
    # and VMEM; for real MobileNetV2 spatial sizes switch to a (pixels, C)
    # matmul formulation / W-tiled grid before scaling up.

    out = fused_mbv2_block(x, w1bd, b1, webd, be, wdw_tiled, bdw, wps, bc,
                           n_groups=n_groups, G=G, Ho=Ho, Wo=Wo,
                           Cin=Cin, Cexp=Cexp, Cout=Cout, K1p=K1p)
    out = out.reshape(N, Ho, Wo, Cout)
    return jnp.transpose(out, (0, 3, 1, 2))       # NCHW, matching the PyTorch module


if __name__ == "__main__":
    key = jax.random.PRNGKey(0)
    k_params, k_x = jax.random.split(key)

    in_channels = 3
    params = make_params(in_channels, k_params)

    x = jax.random.normal(k_x, (2, in_channels, 16, 16), jnp.float32)  # NCHW
    out = mobilenetv2_forward(x, params)
    out = jax.block_until_ready(out)
    assert out.shape == (2, 16, 8, 8), out.shape
    print("KERNEL_OK")
</pallas_src>

<mosaic_0001>
module attributes {stable_mosaic.version = 11 : i64} {
  func.func @_fused_mbv2_kernel(%arg0: i32, %arg1: memref<1x36x54xf32, #tpu.memory_space<vmem>>, %arg2: memref<256x256xbf16, #tpu.memory_space<vmem>>, %arg3: memref<1x256xf32, #tpu.memory_space<vmem>>, %arg4: memref<256x256xbf16, #tpu.memory_space<vmem>>, %arg5: memref<1x256xf32, #tpu.memory_space<vmem>>, %arg6: memref<9x16x256xf32, #tpu.memory_space<vmem>>, %arg7: memref<1x256xf32, #tpu.memory_space<vmem>>, %arg8: memref<512x128xbf16, #tpu.memory_space<vmem>>, %arg9: memref<1x128xf32, #tpu.memory_space<vmem>>, %arg10: memref<1x16x128xf32, #tpu.memory_space<vmem>>, %arg11: memref<16x256xf32, #tpu.memory_space<vmem>>) attributes {dimension_semantics = [#tpu.dimension_semantics<parallel>], iteration_bounds = array<i64: 1>, scalar_prefetch = 0 : i64, scratch_operands = 1 : i64, tpu.core_type = #tpu.core_type<tc>, window_params = [{transform_indices = @transform_0, window_bounds = array<i64: 1, 36, 54>}, {pipeline_mode = #tpu.pipeline_mode<synchronous>, transform_indices = @transform_1, window_bounds = array<i64: 256, 256>}, {pipeline_mode = #tpu.pipeline_mode<synchronous>, transform_indices = @transform_2, window_bounds = array<i64: 1, 256>}, {pipeline_mode = #tpu.pipeline_mode<synchronous>, transform_indices = @transform_3, window_bounds = array<i64: 256, 256>}, {pipeline_mode = #tpu.pipeline_mode<synchronous>, transform_indices = @transform_4, window_bounds = array<i64: 1, 256>}, {pipeline_mode = #tpu.pipeline_mode<synchronous>, transform_indices = @transform_5, window_bounds = array<i64: 9, 16, 256>}, {pipeline_mode = #tpu.pipeline_mode<synchronous>, transform_indices = @transform_6, window_bounds = array<i64: 1, 256>}, {pipeline_mode = #tpu.pipeline_mode<synchronous>, transform_indices = @transform_7, window_bounds = array<i64: 512, 128>}, {pipeline_mode = #tpu.pipeline_mode<synchronous>, transform_indices = @transform_8, window_bounds = array<i64: 1, 128>}, {transform_indices = @transform_9, window_bounds = array<i64: 1, 16, 128>}]} {
    %cst = arith.constant 0.000000e+00 : f32
    %0 = vector.broadcast %cst : f32 to vector<16x256xf32>
    %c0 = arith.constant 0 : index
    %c0_0 = arith.constant 0 : index
    %1 = vector.load %arg11[%c0, %c0_0] : memref<16x256xf32, #tpu.memory_space<vmem>>, vector<16x256xf32>
    tpu.vector_store %arg11[%c0, %c0_0], %0 {strides = array<i32>} : memref<16x256xf32, #tpu.memory_space<vmem>>, vector<16x256xf32>,
    %c0_1 = arith.constant 0 : index
    %c0_2 = arith.constant 0 : index
    %c0_3 = arith.constant 0 : index
    %2 = vector.load %arg1[%c0_1, %c0_2, %c0_3] : memref<1x36x54xf32, #tpu.memory_space<vmem>>, vector<1x8x24xf32>
    %3 = vector.shape_cast %2 : vector<1x8x24xf32> to vector<8x24xf32>
    %c0_4 = arith.constant 0 : index
    %c0_5 = arith.constant 0 : index
    %4 = vector.load %arg11[%c0_4, %c0_5] : memref<16x256xf32, #tpu.memory_space<vmem>>, vector<8x24xf32>
    tpu.vector_store %arg11[%c0_4, %c0_5], %3 {strides = array<i32>} : memref<16x256xf32, #tpu.memory_space<vmem>>, vector<8x24xf32>,
    %c0_6 = arith.constant 0 : index
    %c18 = arith.constant 18 : index
    %c0_7 = arith.constant 0 : index
    %5 = vector.load %arg1[%c0_6, %c18, %c0_7] : memref<1x36x54xf32, #tpu.memory_space<vmem>>, vector<1x8x24xf32>
    %6 = vector.shape_cast %5 : vector<1x8x24xf32> to vector<8x24xf32>
    %c8 = arith.constant 8 : index
    %c0_8 = arith.constant 0 : index
    %7 = vector.load %arg11[%c8, %c0_8] : memref<16x256xf32, #tpu.memory_space<vmem>>, vector<8x24xf32>
    tpu.vector_store %arg11[%c8, %c0_8], %6 {strides = array<i32>} : memref<16x256xf32, #tpu.memory_space<vmem>>, vector<8x24xf32>,
    %c0_9 = arith.constant 0 : index
    %c0_10 = arith.constant 0 : index
    %c27 = arith.constant 27 : index
    %8 = vector.load %arg1[%c0_9, %c0_10, %c27] : memref<1x36x54xf32, #tpu.memory_space<vmem>>, vector<1x8x24xf32>
    %9 = vector.shape_cast %8 : vector<1x8x24xf32> to vector<8x24xf32>
    %c0_11 = arith.constant 0 : index
    %c24 = arith.constant 24 : index
    %10 = vector.load %arg11[%c0_11, %c24] : memref<16x256xf32, #tpu.memory_space<vmem>>, vector<8x24xf32>
    tpu.vector_store %arg11[%c0_11, %c24], %9 {strides = array<i32>} : memref<16x256xf32, #tpu.memory_space<vmem>>, vector<8x24xf32>,
    %c0_12 = arith.constant 0 : index
    %c18_13 = arith.constant 18 : index
    %c27_14 = arith.constant 27 : index
    %11 = vector.load %arg1[%c0_12, %c18_13, %c27_14] : memref<1x36x54xf32, #tpu.memory_space<vmem>>, vector<1x8x24xf32>
    %12 = vector.shape_cast %11 : vector<1x8x24xf32> to vector<8x24xf32>
    %c8_15 = arith.constant 8 : index
    %c24_16 = arith.constant 24 : index
    %13 = vector.load %arg11[%c8_15, %c24_16] : memref<16x256xf32, #tpu.memory_space<vmem>>, vector<8x24xf32>
    tpu.vector_store %arg11[%c8_15, %c24_16], %12 {strides = array<i32>} : memref<16x256xf32, #tpu.memory_space<vmem>>, vector<8x24xf32>,
    %c0_17 = arith.constant 0 : index
    %c0_18 = arith.constant 0 : index
    %c3 = arith.constant 3 : index
    %14 = vector.load %arg1[%c0_17, %c0_18, %c3] : memref<1x36x54xf32, #tpu.memory_space<vmem>>, vector<1x8x24xf32>
    %15 = vector.shape_cast %14 : vector<1x8x24xf32> to vector<8x24xf32>
    %c0_19 = arith.constant 0 : index
    %c48 = arith.constant 48 : index
    %16 = vector.load %arg11[%c0_19, %c48] : memref<16x256xf32, #tpu.memory_space<vmem>>, vector<8x24xf32>
    tpu.vector_store %arg11[%c0_19, %c48], %15 {strides = array<i32>} : memref<16x256xf32, #tpu.memory_space<vmem>>, vector<8x24xf32>,
    %c0_20 = arith.constant 0 : index
    %c18_21 = arith.constant 18 : index
    %c3_22 = arith.constant 3 : index
    %17 = vector.load %arg1[%c0_20, %c18_21, %c3_22] : memref<1x36x54xf32, #tpu.memory_space<vmem>>, vector<1x8x24xf32>
    %18 = vector.shape_cast %17 : vector<1x8x24xf32> to vector<8x24xf32>
    %c8_23 = arith.constant 8 : index
    %c48_24 = arith.constant 48 : index
    %19 = vector.load %arg11[%c8_23, %c48_24] : memref<16x256xf32, #tpu.memory_space<vmem>>, vector<8x24xf32>
    tpu.vector_store %arg11[%c8_23, %c48_24], %18 {strides = array<i32>} : memref<16x256xf32, #tpu.memory_space<vmem>>, vector<8x24xf32>,
    %c0_25 = arith.constant 0 : index
    %c9 = arith.constant 9 : index
    %c0_26 = arith.constant 0 : index
    %20 = vector.load %arg1[%c0_25, %c9, %c0_26] : memref<1x36x54xf32, #tpu.memory_space<vmem>>, vector<1x8x24xf32>
    %21 = vector.shape_cast %20 : vector<1x8x24xf32> to vector<8x24xf32>
    %c0_27 = arith.constant 0 : index
    %c72 = arith.constant 72 : index
    %22 = vector.load %arg11[%c0_27, %c72] : memref<16x256xf32, #tpu.memory_space<vmem>>, vector<8x24xf32>
    tpu.vector_store %arg11[%c0_27, %c72], %21 {strides = array<i32>} : memref<16x256xf32, #tpu.memory_space<vmem>>, vector<8x24xf32>,
    %c0_28 = arith.constant 0 : index
    %c27_29 = arith.constant 27 : index
    %c0_30 = arith.constant 0 : index
    %23 = vector.load %arg1[%c0_28, %c27_29, %c0_30] : memref<1x36x54xf32, #tpu.memory_space<vmem>>, vector<1x8x24xf32>
    %24 = vector.shape_cast %23 : vector<1x8x24xf32> to vector<8x24xf32>
    %c8_31 = arith.constant 8 : index
    %c72_32 = arith.constant 72 : index
    %25 = vector.load %arg11[%c8_31, %c72_32] : memref<16x256xf32, #tpu.memory_space<vmem>>, vector<8x24xf32>
    tpu.vector_store %arg11[%c8_31, %c72_32], %24 {strides = array<i32>} : memref<16x256xf32, #tpu.memory_space<vmem>>, vector<8x24xf32>,
    %c0_33 = arith.constant 0 : index
    %c9_34 = arith.constant 9 : index
    %c27_35 = arith.constant 27 : index
    %26 = vector.load %arg1[%c0_33, %c9_34, %c27_35] : memref<1x36x54xf32, #tpu.memory_space<vmem>>, vector<1x8x24xf32>
    %27 = vector.shape_cast %26 : vector<1x8x24xf32> to vector<8x24xf32>
    %c0_36 = arith.constant 0 : index
    %c96 = arith.constant 96 : index
    %28 = vector.load %arg11[%c0_36, %c96] : memref<16x256xf32, #tpu.memory_space<vmem>>, vector<8x24xf32>
    tpu.vector_store %arg11[%c0_36, %c96], %27 {strides = array<i32>} : memref<16x256xf32, #tpu.memory_space<vmem>>, vector<8x24xf32>,
    %c0_37 = arith.constant 0 : index
    %c27_38 = arith.constant 27 : index
    %c27_39 = arith.constant 27 : index
    %29 = vector.load %arg1[%c0_37, %c27_38, %c27_39] : memref<1x36x54xf32, #tpu.memory_space<vmem>>, vector<1x8x24xf32>
    %30 = vector.shape_cast %29 : vector<1x8x24xf32> to vector<8x24xf32>
    %c8_40 = arith.constant 8 : index
    %c96_41 = arith.constant 96 : index
    %31 = vector.load %arg11[%c8_40, %c96_41] : memref<16x256xf32, #tpu.memory_space<vmem>>, vector<8x24xf32>
    tpu.vector_store %arg11[%c8_40, %c96_41], %30 {strides = array<i32>} : memref<16x256xf32, #tpu.memory_space<vmem>>, vector<8x24xf32>,
    %c0_42 = arith.constant 0 : index
    %c9_43 = arith.constant 9 : index
    %c3_44 = arith.constant 3 : index
    %32 = vector.load %arg1[%c0_42, %c9_43, %c3_44] : memref<1x36x54xf32, #tpu.memory_space<vmem>>, vector<1x8x24xf32>
    %33 = vector.shape_cast %32 : vector<1x8x24xf32> to vector<8x24xf32>
    %c0_45 = arith.constant 0 : index
    %c120 = arith.constant 120 : index
    %34 = vector.load %arg11[%c0_45, %c120] : memref<16x256xf32, #tpu.memory_space<vmem>>, vector<8x24xf32>
    tpu.vector_store %arg11[%c0_45, %c120], %33 {strides = array<i32>} : memref<16x256xf32, #tpu.memory_space<vmem>>, vector<8x24xf32>,
    %c0_46 = arith.constant 0 : index
    %c27_47 = arith.constant 27 : index
    %c3_48 = arith.constant 3 : index
    %35 = vector.load %arg1[%c0_46, %c27_47, %c3_48] : memref<1x36x54xf32, #tpu.memory_space<vmem>>, vector<1x8x24xf32>
    %36 = vector.shape_cast %35 : vector<1x8x24xf32> to vector<8x24xf32>
    %c8_49 = arith.constant 8 : index
    %c120_50 = arith.constant 120 : index
    %37 = vector.load %arg11[%c8_49, %c120_50] : memref<16x256xf32, #tpu.memory_space<vmem>>, vector<8x24xf32>
    tpu.vector_store %arg11[%c8_49, %c120_50], %36 {strides = array<i32>} : memref<16x256xf32, #tpu.memory_space<vmem>>, vector<8x24xf32>,
    %c0_51 = arith.constant 0 : index
    %c1 = arith.constant 1 : index
    %c0_52 = arith.constant 0 : index
    %38 = vector.load %arg1[%c0_51, %c1, %c0_52] : memref<1x36x54xf32, #tpu.memory_space<vmem>>, vector<1x8x24xf32>
    %39 = vector.shape_cast %38 : vector<1x8x24xf32> to vector<8x24xf32>
    %c0_53 = arith.constant 0 : index
    %c144 = arith.constant 144 : index
    %40 = vector.load %arg11[%c0_53, %c144] : memref<16x256xf32, #tpu.memory_space<vmem>>, vector<8x24xf32>
    tpu.vector_store %arg11[%c0_53, %c144], %39 {strides = array<i32>} : memref<16x256xf32, #tpu.memory_space<vmem>>, vector<8x24xf32>,
    %c0_54 = arith.constant 0 : index
    %c19 = arith.constant 19 : index
    %c0_55 = arith.constant 0 : index
    %41 = vector.load %arg1[%c0_54, %c19, %c0_55] : memref<1x36x54xf32, #tpu.memory_space<vmem>>, vector<1x8x24xf32>
    %42 = vector.shape_cast %41 : vector<1x8x24xf32> to vector<8x24xf32>
    %c8_56 = arith.constant 8 : index
    %c144_57 = arith.constant 144 : index
    %43 = vector.load %arg11[%c8_56, %c144_57] : memref<16x256xf32, #tpu.memory_space<vmem>>, vector<8x24xf32>
    tpu.vector_store %arg11[%c8_56, %c144_57], %42 {strides = array<i32>} : memref<16x256xf32, #tpu.memory_space<vmem>>, vector<8x24xf32>,
    %c0_58 = arith.constant 0 : index
    %c1_59 = arith.constant 1 : index
    %c27_60 = arith.constant 27 : index
    %44 = vector.load %arg1[%c0_58, %c1_59, %c27_60] : memref<1x36x54xf32, #tpu.memory_space<vmem>>, vector<1x8x24xf32>
    %45 = vector.shape_cast %44 : vector<1x8x24xf32> to vector<8x24xf32>
    %c0_61 = arith.constant 0 : index
    %c168 = arith.constant 168 : index
    %46 = vector.load %arg11[%c0_61, %c168] : memref<16x256xf32, #tpu.memory_space<vmem>>, vector<8x24xf32>
    tpu.vector_store %arg11[%c0_61, %c168], %45 {strides = array<i32>} : memref<16x256xf32, #tpu.memory_space<vmem>>, vector<8x24xf32>,
    %c0_62 = arith.constant 0 : index
    %c19_63 = arith.constant 19 : index
    %c27_64 = arith.constant 27 : index
    %47 = vector.load %arg1[%c0_62, %c19_63, %c27_64] : memref<1x36x54xf32, #tpu.memory_space<vmem>>, vector<1x8x24xf32>
    %48 = vector.shape_cast %47 : vector<1x8x24xf32> to vector<8x24xf32>
    %c8_65 = arith.constant 8 : index
    %c168_66 = arith.constant 168 : index
    %49 = vector.load %arg11[%c8_65, %c168_66] : memref<16x256xf32, #tpu.memory_space<vmem>>, vector<8x24xf32>
    tpu.vector_store %arg11[%c8_65, %c168_66], %48 {strides = array<i32>} : memref<16x256xf32, #tpu.memory_space<vmem>>, vector<8x24xf32>,
    %c0_67 = arith.constant 0 : index
    %c1_68 = arith.constant 1 : index
    %c3_69 = arith.constant 3 : index
    %50 = vector.load %arg1[%c0_67, %c1_68, %c3_69] : memref<1x36x54xf32, #tpu.memory_space<vmem>>, vector<1x8x24xf32>
    %51 = vector.shape_cast %50 : vector<1x8x24xf32> to vector<8x24xf32>
    %c0_70 = arith.constant 0 : index
    %c192 = arith.constant 192 : index
    %52 = vector.load %arg11[%c0_70, %c192] : memref<16x256xf32, #tpu.memory_space<vmem>>, vector<8x24xf32>
    tpu.vector_store %arg11[%c0_70, %c192], %51 {strides = array<i32>} : memref<16x256xf32, #tpu.memory_space<vmem>>, vector<8x24xf32>,
    %c0_71 = arith.constant 0 : index
    %c19_72 = arith.constant 19 : index
    %c3_73 = arith.constant 3 : index
    %53 = vector.load %arg1[%c0_71, %c19_72, %c3_73] : memref<1x36x54xf32, #tpu.memory_space<vmem>>, vector<1x8x24xf32>
    %54 = vector.shape_cast %53 : vector<1x8x24xf32> to vector<8x24xf32>
    %c8_74 = arith.constant 8 : index
    %c192_75 = arith.constant 192 : index
    %55 = vector.load %arg11[%c8_74, %c192_75] : memref<16x256xf32, #tpu.memory_space<vmem>>, vector<8x24xf32>
    tpu.vector_store %arg11[%c8_74, %c192_75], %54 {strides = array<i32>} : memref<16x256xf32, #tpu.memory_space<vmem>>, vector<8x24xf32>,
    %c0_76 = arith.constant 0 : index
    %c0_77 = arith.constant 0 : index
    %56 = vector.load %arg11[%c0_76, %c0_77] : memref<16x256xf32, #tpu.memory_space<vmem>>, vector<16x256xf32>
    %57 = arith.truncf %56 : vector<16x256xf32> to vector<16x256xbf16>
    %c0_78 = arith.constant 0 : index
    %c0_79 = arith.constant 0 : index
    %58 = vector.load %arg2[%c0_78, %c0_79] : memref<256x256xbf16, #tpu.memory_space<vmem>>, vector<256x256xbf16>
    %cst_80 = arith.constant dense<0.000000e+00> : vector<16x256xf32>
    %59 = tpu.matmul %57, %58, %cst_80 {dimension_numbers = #tpu.dot_dimension_numbers<[1], [0], [0], [1], [0, 0, 1, 1], [], []>} : vector<16x256xbf16>, vector<256x256xbf16>, vector<16x256xf32> -> vector<16x256xf32>
    %c0_81 = arith.constant 0 : index
    %c0_82 = arith.constant 0 : index
    %60 = vector.load %arg3[%c0_81, %c0_82] : memref<1x256xf32, #tpu.memory_space<vmem>>, vector<1x256xf32>
    %61 = vector.broadcast %60 : vector<1x256xf32> to vector<16x256xf32>
    %62 = arith.addf %59, %61 : vector<16x256xf32>
    %cst_83 = arith.constant 0.000000e+00 : f32
    %63 = vector.broadcast %cst_83 : f32 to vector<16x256xf32>
    %64 = arith.maximumf %62, %63 : vector<16x256xf32>
    %cst_84 = arith.constant 6.000000e+00 : f32
    %65 = vector.broadcast %cst_84 : f32 to vector<16x256xf32>
    %66 = arith.minimumf %64, %65 : vector<16x256xf32>
    %67 = arith.truncf %66 : vector<16x256xf32> to vector<16x256xbf16>
    %c0_85 = arith.constant 0 : index
    %c0_86 = arith.constant 0 : index
    %68 = vector.load %arg4[%c0_85, %c0_86] : memref<256x256xbf16, #tpu.memory_space<vmem>>, vector<256x256xbf16>
    %cst_87 = arith.constant dense<0.000000e+00> : vector<16x256xf32>
    %69 = tpu.matmul %67, %68, %cst_87 {dimension_numbers = #tpu.dot_dimension_numbers<[1], [0], [0], [1], [0, 0, 1, 1], [], []>} : vector<16x256xbf16>, vector<256x256xbf16>, vector<16x256xf32> -> vector<16x256xf32>
    %c0_88 = arith.constant 0 : index
    %c0_89 = arith.constant 0 : index
    %70 = vector.load %arg5[%c0_88, %c0_89] : memref<1x256xf32, #tpu.memory_space<vmem>>, vector<1x256xf32>
    %71 = vector.broadcast %70 : vector<1x256xf32> to vector<16x256xf32>
    %72 = arith.addf %69, %71 : vector<16x256xf32>
    %cst_90 = arith.constant 0.000000e+00 : f32
    %73 = vector.broadcast %cst_90 : f32 to vector<16x256xf32>
    %74 = arith.maximumf %72, %73 : vector<16x256xf32>
    %cst_91 = arith.constant 6.000000e+00 : f32
    %75 = vector.broadcast %cst_91 : f32 to vector<16x256xf32>
    %76 = arith.minimumf %74, %75 : vector<16x256xf32>
    %77 = tpu.iota {dimensions = array<i32: 0>} : vector<16x256xi32>
    %c8_i32 = arith.constant 8 : i32
    %c0_i32 = arith.constant 0 : i32
    %78 = arith.cmpi eq, %c8_i32, %c0_i32 : i32
    %c1_i32 = arith.constant 1 : i32
    %79 = arith.select %78, %c1_i32, %c8_i32 : i32
    %80 = vector.broadcast %79 : i32 to vector<16x256xi32>
    %81 = arith.remsi %77, %80 : vector<16x256xi32>
    %c0_i32_92 = arith.constant 0 : i32
    %82 = vector.broadcast %c0_i32_92 : i32 to vector<16x256xi32>
    %83 = arith.cmpi ne, %81, %82 : vector<16x256xi32>
    %c0_i32_93 = arith.constant 0 : i32
    %84 = vector.broadcast %c0_i32_93 : i32 to vector<16x256xi32>
    %85 = arith.cmpi slt, %81, %84 : vector<16x256xi32>
    %c0_i32_94 = arith.constant 0 : i32
    %86 = arith.cmpi slt, %79, %c0_i32_94 : i32
    %87 = vector.broadcast %86 : i1 to vector<16x256xi1>
    %88 = vector.broadcast %87 : vector<16x256xi1> to vector<16x256xi1>
    %89 = arith.xori %85, %88 : vector<16x256xi1>
    %90 = arith.andi %89, %83 : vector<16x256xi1>
    %91 = vector.broadcast %79 : i32 to vector<16x256xi32>
    %92 = arith.addi %81, %91 : vector<16x256xi32>
    %93 = arith.select %90, %92, %81 : vector<16x256xi1>, vector<16x256xi32>
    %cst_95 = arith.constant 0.000000e+00 : f32
    %94 = vector.broadcast %cst_95 : f32 to vector<16x256xf32>
    %c1_i32_96 = arith.constant 1 : i32
    %95 = tpu.dynamic_rotate %76 by %c1_i32_96 dim 0 : vector<16x256xf32>, i32 -> vector<16x256xf32>
    %c1_i32_97 = arith.constant 1 : i32
    %96 = vector.broadcast %c1_i32_97 : i32 to vector<16x256xi32>
    %97 = arith.cmpi sge, %93, %96 : vector<16x256xi32>
    %cst_98 = arith.constant 0.000000e+00 : f32
    %98 = vector.broadcast %cst_98 : f32 to vector<16x256xf32>
    %99 = arith.select %97, %95, %98 : vector<16x256xi1>, vector<16x256xf32>
    %c32_i32 = arith.constant 32 : i32
    %100 = tpu.dynamic_rotate %99 by %c32_i32 dim 1 : vector<16x256xf32>, i32 -> vector<16x256xf32>
    %c0_99 = arith.constant 0 : index
    %c0_100 = arith.constant 0 : index
    %c0_101 = arith.constant 0 : index
    %101 = vector.load %arg6[%c0_99, %c0_100, %c0_101] : memref<9x16x256xf32, #tpu.memory_space<vmem>>, vector<1x16x256xf32>
    %102 = vector.shape_cast %101 : vector<1x16x256xf32> to vector<16x256xf32>
    %103 = arith.mulf %100, %102 : vector<16x256xf32>
    %104 = arith.addf %94, %103 : vector<16x256xf32>
    %c1_102 = arith.constant 1 : index
    %c0_103 = arith.constant 0 : index
    %c0_104 = arith.constant 0 : index
    %105 = vector.load %arg6[%c1_102, %c0_103, %c0_104] : memref<9x16x256xf32, #tpu.memory_space<vmem>>, vector<1x16x256xf32>
    %106 = vector.shape_cast %105 : vector<1x16x256xf32> to vector<16x256xf32>
    %107 = arith.mulf %99, %106 : vector<16x256xf32>
    %108 = arith.addf %104, %107 : vector<16x256xf32>
    %c224_i32 = arith.constant 224 : i32
    %109 = tpu.dynamic_rotate %99 by %c224_i32 dim 1 : vector<16x256xf32>, i32 -> vector<16x256xf32>
    %c2 = arith.constant 2 : index
    %c0_105 = arith.constant 0 : index
    %c0_106 = arith.constant 0 : index
    %110 = vector.load %arg6[%c2, %c0_105, %c0_106] : memref<9x16x256xf32, #tpu.memory_space<vmem>>, vector<1x16x256xf32>
    %111 = vector.shape_cast %110 : vector<1x16x256xf32> to vector<16x256xf32>
    %112 = arith.mulf %109, %111 : vector<16x256xf32>
    %113 = arith.addf %108, %112 : vector<16x256xf32>
    %c32_i32_107 = arith.constant 32 : i32
    %114 = tpu.dynamic_rotate %76 by %c32_i32_107 dim 1 : vector<16x256xf32>, i32 -> vector<16x256xf32>
    %c3_108 = arith.constant 3 : index
    %c0_109 = arith.constant 0 : index
    %c0_110 = arith.constant 0 : index
    %115 = vector.load %arg6[%c3_108, %c0_109, %c0_110] : memref<9x16x256xf32, #tpu.memory_space<vmem>>, vector<1x16x256xf32>
    %116 = vector.shape_cast %115 : vector<1x16x256xf32> to vector<16x256xf32>
    %117 = arith.mulf %114, %116 : vector<16x256xf32>
    %118 = arith.addf %113, %117 : vector<16x256xf32>
    %c4 = arith.constant 4 : index
    %c0_111 = arith.constant 0 : index
    %c0_112 = arith.constant 0 : index
    %119 = vector.load %arg6[%c4, %c0_111, %c0_112] : memref<9x16x256xf32, #tpu.memory_space<vmem>>, vector<1x16x256xf32>
    %120 = vector.shape_cast %119 : vector<1x16x256xf32> to vector<16x256xf32>
    %121 = arith.mulf %76, %120 : vector<16x256xf32>
    %122 = arith.addf %118, %121 : vector<16x256xf32>
    %c224_i32_113 = arith.constant 224 : i32
    %123 = tpu.dynamic_rotate %76 by %c224_i32_113 dim 1 : vector<16x256xf32>, i32 -> vector<16x256xf32>
    %c5 = arith.constant 5 : index
    %c0_114 = arith.constant 0 : index
    %c0_115 = arith.constant 0 : index
    %124 = vector.load %arg6[%c5, %c0_114, %c0_115] : memref<9x16x256xf32, #tpu.memory_space<vmem>>, vector<1x16x256xf32>
    %125 = vector.shape_cast %124 : vector<1x16x256xf32> to vector<16x256xf32>
    %126 = arith.mulf %123, %125 : vector<16x256xf32>
    %127 = arith.addf %122, %126 : vector<16x256xf32>
    %c15_i32 = arith.constant 15 : i32
    %128 = tpu.dynamic_rotate %76 by %c15_i32 dim 0 : vector<16x256xf32>, i32 -> vector<16x256xf32>
    %c7_i32 = arith.constant 7 : i32
    %129 = vector.broadcast %c7_i32 : i32 to vector<16x256xi32>
    %130 = arith.cmpi slt, %93, %129 : vector<16x256xi32>
    %cst_116 = arith.constant 0.000000e+00 : f32
    %131 = vector.broadcast %cst_116 : f32 to vector<16x256xf32>
    %132 = arith.select %130, %128, %131 : vector<16x256xi1>, vector<16x256xf32>
    %c32_i32_117 = arith.constant 32 : i32
    %133 = tpu.dynamic_rotate %132 by %c32_i32_117 dim 1 : vector<16x256xf32>, i32 -> vector<16x256xf32>
    %c6 = arith.constant 6 : index
    %c0_118 = arith.constant 0 : index
    %c0_119 = arith.constant 0 : index
    %134 = vector.load %arg6[%c6, %c0_118, %c0_119] : memref<9x16x256xf32, #tpu.memory_space<vmem>>, vector<1x16x256xf32>
    %135 = vector.shape_cast %134 : vector<1x16x256xf32> to vector<16x256xf32>
    %136 = arith.mulf %133, %135 : vector<16x256xf32>
    %137 = arith.addf %127, %136 : vector<16x256xf32>
    %c7 = arith.constant 7 : index
    %c0_120 = arith.constant 0 : index
    %c0_121 = arith.constant 0 : index
    %138 = vector.load %arg6[%c7, %c0_120, %c0_121] : memref<9x16x256xf32, #tpu.memory_space<vmem>>, vector<1x16x256xf32>
    %139 = vector.shape_cast %138 : vector<1x16x256xf32> to vector<16x256xf32>
    %140 = arith.mulf %132, %139 : vector<16x256xf32>
    %141 = arith.addf %137, %140 : vector<16x256xf32>
    %c224_i32_122 = arith.constant 224 : i32
    %142 = tpu.dynamic_rotate %132 by %c224_i32_122 dim 1 : vector<16x256xf32>, i32 -> vector<16x256xf32>
    %c8_123 = arith.constant 8 : index
    %c0_124 = arith.constant 0 : index
    %c0_125 = arith.constant 0 : index
    %143 = vector.load %arg6[%c8_123, %c0_124, %c0_125] : memref<9x16x256xf32, #tpu.memory_space<vmem>>, vector<1x16x256xf32>
    %144 = vector.shape_cast %143 : vector<1x16x256xf32> to vector<16x256xf32>
    %145 = arith.mulf %142, %144 : vector<16x256xf32>
    %146 = arith.addf %141, %145 : vector<16x256xf32>
    %c0_126 = arith.constant 0 : index
    %c0_127 = arith.constant 0 : index
    %147 = vector.load %arg7[%c0_126, %c0_127] : memref<1x256xf32, #tpu.memory_space<vmem>>, vector<1x256xf32>
    %148 = vector.broadcast %147 : vector<1x256xf32> to vector<16x256xf32>
    %149 = arith.addf %146, %148 : vector<16x256xf32>
    %cst_128 = arith.constant 0.000000e+00 : f32
    %150 = vector.broadcast %cst_128 : f32 to vector<16x256xf32>
    %151 = arith.maximumf %149, %150 : vector<16x256xf32>
    %152 = arith.truncf %151 : vector<16x256xf32> to vector<16x256xbf16>
    %153 = tpu.concatenate %152, %67 in 1 : vector<16x256xbf16>, vector<16x256xbf16> -> vector<16x512xbf16>
    %c0_129 = arith.constant 0 : index
    %c0_130 = arith.constant 0 : index
    %154 = vector.load %arg8[%c0_129, %c0_130] : memref<512x128xbf16, #tpu.memory_space<vmem>>, vector<512x128xbf16>
    %cst_131 = arith.constant dense<0.000000e+00> : vector<16x128xf32>
    %155 = tpu.matmul %153, %154, %cst_131 {dimension_numbers = #tpu.dot_dimension_numbers<[1], [0], [0], [1], [0, 0, 1, 1], [], []>} : vector<16x512xbf16>, vector<512x128xbf16>, vector<16x128xf32> -> vector<16x128xf32>
    %c0_132 = arith.constant 0 : index
    %c0_133 = arith.constant 0 : index
    %156 = vector.load %arg9[%c0_132, %c0_133] : memref<1x128xf32, #tpu.memory_space<vmem>>, vector<1x128xf32>
    %157 = vector.broadcast %156 : vector<1x128xf32> to vector<16x128xf32>
    %158 = arith.addf %155, %157 : vector<16x128xf32>
    %c0_134 = arith.constant 0 : index
    %c0_135 = arith.constant 0 : index
    %c0_136 = arith.constant 0 : index
    %159 = vector.load %arg10[%c0_134, %c0_135, %c0_136] : memref<1x16x128xf32, #tpu.memory_space<vmem>>, vector<1x16x128xf32>
    %160 = vector.shape_cast %159 : vector<1x16x128xf32> to vector<16x128xf32>
    %161 = vector.shape_cast %158 : vector<16x128xf32> to vector<1x16x128xf32>
    tpu.vector_store %arg10[%c0_134, %c0_135, %c0_136], %161 {strides = array<i32>} : memref<1x16x128xf32, #tpu.memory_space<vmem>>, vector<1x16x128xf32>,
    return
  }
  func.func @transform_0(%arg0: i32) -> (i32, i32, i32) {
    %c0_i32 = arith.constant 0 : i32
    %c0_i32_0 = arith.constant 0 : i32
    %c0_i32_1 = arith.constant 0 : i32
    return %arg0, %c0_i32, %c0_i32_0 : i32, i32, i32
  }
  func.func @transform_1(%arg0: i32) -> (i32, i32) {
    %c0_i32 = arith.constant 0 : i32
    %c0_i32_0 = arith.constant 0 : i32
    %c0_i32_1 = arith.constant 0 : i32
    return %c0_i32, %c0_i32_0 : i32, i32
  }
  func.func @transform_2(%arg0: i32) -> (i32, i32) {
    %c0_i32 = arith.constant 0 : i32
    %c0_i32_0 = arith.constant 0 : i32
    %c0_i32_1 = arith.constant 0 : i32
    return %c0_i32, %c0_i32_0 : i32, i32
  }
  func.func @transform_3(%arg0: i32) -> (i32, i32) {
    %c0_i32 = arith.constant 0 : i32
    %c0_i32_0 = arith.constant 0 : i32
    %c0_i32_1 = arith.constant 0 : i32
    return %c0_i32, %c0_i32_0 : i32, i32
  }
  func.func @transform_4(%arg0: i32) -> (i32, i32) {
    %c0_i32 = arith.constant 0 : i32
    %c0_i32_0 = arith.constant 0 : i32
    %c0_i32_1 = arith.constant 0 : i32
    return %c0_i32, %c0_i32_0 : i32, i32
  }
  func.func @transform_5(%arg0: i32) -> (i32, i32, i32) {
    %c0_i32 = arith.constant 0 : i32
    %c0_i32_0 = arith.constant 0 : i32
    %c0_i32_1 = arith.constant 0 : i32
    %c0_i32_2 = arith.constant 0 : i32
    return %c0_i32, %c0_i32_0, %c0_i32_1 : i32, i32, i32
  }
  func.func @transform_6(%arg0: i32) -> (i32, i32) {
    %c0_i32 = arith.constant 0 : i32
    %c0_i32_0 = arith.constant 0 : i32
    %c0_i32_1 = arith.constant 0 : i32
    return %c0_i32, %c0_i32_0 : i32, i32
  }
  func.func @transform_7(%arg0: i32) -> (i32, i32) {
    %c0_i32 = arith.constant 0 : i32
    %c0_i32_0 = arith.constant 0 : i32
    %c0_i32_1 = arith.constant 0 : i32
    return %c0_i32, %c0_i32_0 : i32, i32
  }
  func.func @transform_8(%arg0: i32) -> (i32, i32) {
    %c0_i32 = arith.constant 0 : i32
    %c0_i32_0 = arith.constant 0 : i32
    %c0_i32_1 = arith.constant 0 : i32
    return %c0_i32, %c0_i32_0 : i32, i32
  }
  func.func @transform_9(%arg0: i32) -> (i32, i32, i32) {
    %c0_i32 = arith.constant 0 : i32
    %c0_i32_0 = arith.constant 0 : i32
    %c0_i32_1 = arith.constant 0 : i32
    return %arg0, %c0_i32, %c0_i32_0 : i32, i32, i32
  }
}

</mosaic_0001>

<llo_original>
// kernel: tpu_custom_call.1
$region0: #{tpu_custom_call.1}
  #allocation0 [shape = 'u32[]', space=smem, size = 0x4, offset = 0x4, fixed_abs, tag = 'smem constant byte address 0x4 - core index']
  #allocation1 [shape = 'u32[72,128]{1,0:T(1,128)}', space=vmem, size = 0x9000, scoped, tag = 'internal scratch']
  #allocation2 [shape = 'f32[16,256]{1,0:T(8,128)}', space=vmem, size = 0x4000, scoped, tag = 'scratch operand']
  %s0 = inlined_call_operand.vmem [shape: f32[1,36,54], index: 0, kind: input, shape index: {}]
  %s1 = inlined_call_operand.hbm [shape: bf16[256,256], index: 1, kind: input, shape index: {}]
  %s2 = inlined_call_operand.vmem [shape: f32[1,256], index: 2, kind: input, shape index: {}]
  %s3 = inlined_call_operand.hbm [shape: bf16[256,256], index: 3, kind: input, shape index: {}]
  %s4 = inlined_call_operand.vmem [shape: f32[1,256], index: 4, kind: input, shape index: {}]
  %s5 = inlined_call_operand.hbm [shape: f32[9,16,256], index: 5, kind: input, shape index: {}]
  %s6 = inlined_call_operand.vmem [shape: f32[1,256], index: 6, kind: input, shape index: {}]
  %s7 = inlined_call_operand.hbm [shape: bf16[512,128], index: 7, kind: input, shape index: {}]
  %s8 = inlined_call_operand.vmem [shape: f32[1,128], index: 8, kind: input, shape index: {}]
  %s9 = inlined_call_operand.hbm [shape: f32[1,16,128], index: 9, kind: output, shape index: {}]
  %s10 = sld [smem:[#allocation0]]
  $region62: #{tpu_custom_call.1} parent=0
    _
  %s12 = ssub.s32 1, %s10
  %s13 = scalar_select 0, %s12, %s10
  $region1: #{tpu_custom_call.1} parent=0
    #allocation3 [shape = 'u8[131072]{0}', space=vmem, size = 0x20000, scoped, tag = 'input window, operand 1, single buffered']
    #allocation4 [shape = 's32[1]{0}', space=sflag, size = 0x4, scoped, tag = 'scoped memory for tpu_custom_call.1']
    #allocation5 [shape = 's32[1]{0}', space=sflag, size = 0x4, scoped, tag = 'scoped memory for tpu_custom_call.1']
    #allocation6 [shape = 'u8[131072]{0}', space=vmem, size = 0x20000, scoped, tag = 'input window, operand 3, single buffered']
    #allocation7 [shape = 's32[1]{0}', space=sflag, size = 0x4, scoped, tag = 'scoped memory for tpu_custom_call.1']
    #allocation8 [shape = 'u8[147456]{0}', space=vmem, size = 0x24000, scoped, tag = 'input window, operand 5, single buffered']
    #allocation9 [shape = 'u8[131072]{0}', space=vmem, size = 0x20000, scoped, tag = 'input window, operand 7, single buffered']
    #allocation10 [shape = 's32[1]{0}', space=sflag, size = 0x4, scoped, tag = 'scoped memory for tpu_custom_call.1']
    #allocation11 [shape = 'u8[8192]{0}', space=vmem, size = 0x2000, scoped, tag = 'output window, operand 0, single buffered']
    %14 = vsyncpa [#allocation4], 0
    %15 = vsyncpa [#allocation7], 0
    %16 = vsyncpa [#allocation10], 0
    %17 = vsyncpa [#allocation5], 0
    // Predicated region
    $region2: #{tpu_custom_call.1} parent=1 // pred_check
      _
    $region3: #{tpu_custom_call.1} parent=1 // pred_check_branch
      %19 = sbr.rel (0) target = $region5
    $region4: #{tpu_custom_call.1} parent=1 // pred_region
      _
    $region5: #{tpu_custom_call.1} parent=1 // pred_fallthru
      _
    // Predicated region
    $region6: #{tpu_custom_call.1} parent=1 // pred_check
      _
    $region7: #{tpu_custom_call.1} parent=1 // pred_check_branch
      %21 = sbr.rel (0) target = $region9
    $region8: #{tpu_custom_call.1} parent=1 // pred_region
      %23 = vsyncadd [#allocation4], 0
      %s24 = sshll.u32 %s1, 4
      %s25 = int_to_ptr.hbm [resolvable:$true] %s24
      %s26 = sshll.u32 [#allocation3], 4
      %s27 = int_to_ptr.vmem [resolvable:$true] %s26
      %32 = dma.hbm_to_vmem [thread:$0]  %s25, 4096, %s27, [#allocation4], 128, 128, 8
    $region9: #{tpu_custom_call.1} parent=1 // pred_fallthru
      _
    // Predicated region
    $region10: #{tpu_custom_call.1} parent=1 // pred_check
      _
    $region11: #{tpu_custom_call.1} parent=1 // pred_check_branch
      %34 = sbr.rel (0) target = $region13
    $region12: #{tpu_custom_call.1} parent=1 // pred_region
      _
    $region13: #{tpu_custom_call.1} parent=1 // pred_fallthru
      _
    // Predicated region
    $region14: #{tpu_custom_call.1} parent=1 // pred_check
      _
    $region15: #{tpu_custom_call.1} parent=1 // pred_check_branch
      %36 = sbr.rel (0) target = $region17
    $region16: #{tpu_custom_call.1} parent=1 // pred_region
      %38 = vsyncadd [#allocation7], 0
      %s39 = sshll.u32 %s3, 4
      %s40 = int_to_ptr.hbm [resolvable:$true] %s39
      %s41 = sshll.u32 [#allocation6], 4
      %s42 = int_to_ptr.vmem [resolvable:$true] %s41
      %47 = dma.hbm_to_vmem [thread:$0]  %s40, 4096, %s42, [#allocation7], 128, 128, 8
    $region17: #{tpu_custom_call.1} parent=1 // pred_fallthru
      _
    // Predicated region
    $region18: #{tpu_custom_call.1} parent=1 // pred_check
      _
    $region19: #{tpu_custom_call.1} parent=1 // pred_check_branch
      %49 = sbr.rel (0) target = $region21
    $region20: #{tpu_custom_call.1} parent=1 // pred_region
      _
    $region21: #{tpu_custom_call.1} parent=1 // pred_fallthru
      _
    // Predicated region
    $region22: #{tpu_custom_call.1} parent=1 // pred_check
      _
    $region23: #{tpu_custom_call.1} parent=1 // pred_check_branch
      %51 = sbr.rel (0) target = $region25
    $region24: #{tpu_custom_call.1} parent=1 // pred_region
      %53 = vsyncadd [#allocation7], 0
      %s54 = sshll.u32 %s5, 4
      %s55 = int_to_ptr.hbm [resolvable:$true] %s54
      %s56 = sshll.u32 [#allocation8], 4
      %s57 = int_to_ptr.vmem [resolvable:$true] %s56
      %62 = dma.hbm_to_vmem [thread:$0]  %s55, 4608, %s57, [#allocation7], 256, 256, 16
    $region25: #{tpu_custom_call.1} parent=1 // pred_fallthru
      _
    // Predicated region
    $region26: #{tpu_custom_call.1} parent=1 // pred_check
      _
    $region27: #{tpu_custom_call.1} parent=1 // pred_check_branch
      %64 = sbr.rel (0) target = $region29
    $region28: #{tpu_custom_call.1} parent=1 // pred_region
      _
    $region29: #{tpu_custom_call.1} parent=1 // pred_fallthru
      _
    // Predicated region
    $region30: #{tpu_custom_call.1} parent=1 // pred_check
      _
    $region31: #{tpu_custom_call.1} parent=1 // pred_check_branch
      %66 = sbr.rel (0) target = $region33
    $region32: #{tpu_custom_call.1} parent=1 // pred_region
      %68 = vsyncadd [#allocation10], 0
      %s69 = sshll.u32 %s7, 4
      %s70 = int_to_ptr.hbm [resolvable:$true] %s69
      %s71 = sshll.u32 [#allocation9], 4
      %s72 = int_to_ptr.vmem [resolvable:$true] %s71
      %77 = dma.hbm_to_vmem [thread:$0]  %s70, 4096, %s72, [#allocation10], 64, 64, 4
    $region33: #{tpu_custom_call.1} parent=1 // pred_fallthru
      _
    // Predicated region
    $region34: #{tpu_custom_call.1} parent=1 // pred_check
      _
    $region35: #{tpu_custom_call.1} parent=1 // pred_check_branch
      %79 = sbr.rel (0) target = $region37
    $region36: #{tpu_custom_call.1} parent=1 // pred_region
      _
    $region37: #{tpu_custom_call.1} parent=1 // pred_fallthru
      _
    // Predicated region
    $region38: #{tpu_custom_call.1} parent=1 // pred_check
      _
    $region39: #{tpu_custom_call.1} parent=1 // pred_check_branch
      %81 = sbr.rel (0) target = $region41
    $region40: #{tpu_custom_call.1} parent=1 // pred_region
      %83 = dma.done [#allocation4], 4096
    $region41: #{tpu_custom_call.1} parent=1 // pred_fallthru
      _
    // Predicated region
    $region42: #{tpu_custom_call.1} parent=1 // pred_check
      _
    $region43: #{tpu_custom_call.1} parent=1 // pred_check_branch
      %85 = sbr.rel (0) target = $region45
    $region44: #{tpu_custom_call.1} parent=1 // pred_region
      %87 = dma.done [#allocation7], 4096
    $region45: #{tpu_custom_call.1} parent=1 // pred_fallthru
      _
    // Predicated region
    $region46: #{tpu_custom_call.1} parent=1 // pred_check
      _
    $region47: #{tpu_custom_call.1} parent=1 // pred_check_branch
      %89 = sbr.rel (0) target = $region49
    $region48: #{tpu_custom_call.1} parent=1 // pred_region
      %91 = dma.done [#allocation7], 4608
    $region49: #{tpu_custom_call.1} parent=1 // pred_fallthru
      _
    // Predicated region
    $region50: #{tpu_custom_call.1} parent=1 // pred_check
      _
    $region51: #{tpu_custom_call.1} parent=1 // pred_check_branch
      %93 = sbr.rel (0) target = $region53
    $region52: #{tpu_custom_call.1} parent=1 // pred_region
      %95 = dma.done [#allocation10], 4096
    $region53: #{tpu_custom_call.1} parent=1 // pred_fallthru
      _
    %96 = vst [vmem:[#allocation2] sm:$0xff] 0.0
    %97 = vst [vmem:[#allocation2 + $0x8] sm:$0xff] 0.0
    %98 = vst [vmem:[#allocation2 + $0x10] sm:$0xff] 0.0
    %99 = vst [vmem:[#allocation2 + $0x18] sm:$0xff] 0.0
    %v100 = vld [vmem:[%s0] sm:$0xff]
    %vm101 = vcmask 195584
    %102 = vst.msk [vmem:[#allocation2] sm:$0xff] %vm101, %v100
    %v103 = vld [vmem:[%s0 + $0x12] sm:$0xff]
    %104 = vst.msk [vmem:[#allocation2 + $0x10] sm:$0xff] %vm101, %v103
    %v105 = vld [vmem:[%s0] sm:$0xff]
    %107 = vrot.lane.b32.xlu0 %v105, 125
    %v108 = vpop.permute.xlu0 %107
    %vm110 = vcmask 392384
    %111 = vst.msk [vmem:[#allocation2] sm:$0xff] %vm110, %v108
    %v112 = vld [vmem:[%s0 + $0x12] sm:$0xff]
    %114 = vrot.lane.b32.xlu0 %v112, 125
    %v115 = vpop.permute.xlu0 %114
    %117 = vst.msk [vmem:[#allocation2 + $0x10] sm:$0xff] %vm110, %v115
    %v118 = vld [vmem:[%s0] sm:$0xff]
    %120 = vrot.lane.b32.xlu0 %v118, 45
    %v121 = vpop.permute.xlu0 %120
    %vm123 = vcmask 589184
    %124 = vst.msk [vmem:[#allocation2] sm:$0xff] %vm123, %v121
    %v125 = vld [vmem:[%s0 + $0x12] sm:$0xff]
    %127 = vrot.lane.b32.xlu0 %v125, 45
    %v128 = vpop.permute.xlu0 %127
    %130 = vst.msk [vmem:[#allocation2 + $0x10] sm:$0xff] %vm123, %v128
    %v131 = vld [vmem:[%s0 + $0x9] sm:$0xff]
    %133 = vrot.lane.b32.xlu0 %v131, 72
    %v134 = vpop.permute.xlu0 %133
    %vm136 = vcmask 785984
    %137 = vst.msk [vmem:[#allocation2] sm:$0xff] %vm136, %v134
    %v138 = vld [vmem:[%s0 + $0x1b] sm:$0xff]
    %140 = vrot.lane.b32.xlu0 %v138, 72
    %v141 = vpop.permute.xlu0 %140
    %143 = vst.msk [vmem:[#allocation2 + $0x10] sm:$0xff] %vm136, %v141
    %v144 = vld [vmem:[%s0 + $0x9] sm:$0xff]
    %146 = vrot.lane.b32.xlu0 %v144, 69
    %v147 = vpop.permute.xlu0 %146
    %vm149 = vcmask 982784
    %150 = vst.msk [vmem:[#allocation2] sm:$0xff] %vm149, %v147
    %v151 = vld [vmem:[%s0 + $0x1b] sm:$0xff]
    %153 = vrot.lane.b32.xlu0 %v151, 69
    %v154 = vpop.permute.xlu0 %153
    %156 = vst.msk [vmem:[#allocation2 + $0x10] sm:$0xff] %vm149, %v154
    %v157 = vld [vmem:[%s0 + $0x9] sm:$0xff]
    %159 = vrot.lane.b32.xlu0 %v157, 117
    %v160 = vpop.permute.xlu0 %159
    %vm162 = vcmask 1048512
    %163 = vst.msk [vmem:[#allocation2] sm:$0xff] %vm162, %v160
    %vm164 = vcmask 130048
    %165 = vst.msk [vmem:[#allocation2 + $0x8] sm:$0xff] %vm164, %v160
    %v166 = vld [vmem:[%s0 + $0x1b] sm:$0xff]
    %168 = vrot.lane.b32.xlu0 %v166, 117
    %v169 = vpop.permute.xlu0 %168
    %171 = vst.msk [vmem:[#allocation2 + $0x10] sm:$0xff] %vm162, %v169
    %172 = vst.msk [vmem:[#allocation2 + $0x18] sm:$0xff] %vm164, %v169
    %v173 = vld [vmem:[%s0 + $0x1] sm:$0xff]
    %175 = vrot.lane.b32.xlu0 %v173, 16
    %v176 = vpop.permute.xlu0 %175
    %vm178 = vcmask 326784
    %179 = vst.msk [vmem:[#allocation2 + $0x8] sm:$0xff] %vm178, %v176
    %v180 = vld [vmem:[%s0 + $0x13] sm:$0xff]
    %182 = vrot.lane.b32.xlu0 %v180, 16
    %v183 = vpop.permute.xlu0 %182
    %185 = vst.msk [vmem:[#allocation2 + $0x18] sm:$0xff] %vm178, %v183
    %v186 = vld [vmem:[%s0 + $0x1] sm:$0xff]
    %188 = vrot.lane.b32.xlu0 %v186, 13
    %v189 = vpop.permute.xlu0 %188
    %vm191 = vcmask 523584
    %192 = vst.msk [vmem:[#allocation2 + $0x8] sm:$0xff] %vm191, %v189
    %v193 = vld [vmem:[%s0 + $0x13] sm:$0xff]
    %195 = vrot.lane.b32.xlu0 %v193, 13
    %v196 = vpop.permute.xlu0 %195
    %198 = vst.msk [vmem:[#allocation2 + $0x18] sm:$0xff] %vm191, %v196
    %v199 = vld [vmem:[%s0 + $0x1] sm:$0xff]
    %201 = vrot.lane.b32.xlu0 %v199, 61
    %v202 = vpop.permute.xlu0 %201
    %vm204 = vcmask 720384
    %205 = vst.msk [vmem:[#allocation2 + $0x8] sm:$0xff] %vm204, %v202
    %v206 = vld [vmem:[%s0 + $0x13] sm:$0xff]
    %208 = vrot.lane.b32.xlu0 %v206, 61
    %v209 = vpop.permute.xlu0 %208
    %211 = vst.msk [vmem:[#allocation2 + $0x18] sm:$0xff] %vm204, %v209
    %v212 = vld [vmem:[#allocation2] sm:$0xff]
    %v213 = vld [vmem:[#allocation2 + $0x8] sm:$0xff]
    %v214 = vld [vmem:[#allocation2 + $0x10] sm:$0xff]
    %v215 = vld [vmem:[#allocation2 + $0x18] sm:$0xff]
    %v216 = vpack.c.bf16 %v214, %v212
    %v217 = vpack.c.bf16 %v215, %v213
    %v218 = vld [vmem:[#allocation3] sm:$0xff]
    %v219 = vld [vmem:[#allocation3 + $0x8] sm:$0xff]
    %v220 = vld [vmem:[#allocation3 + $0x10] sm:$0xff]
    %v221 = vld [vmem:[#allocation3 + $0x18] sm:$0xff]
    %v222 = vld [vmem:[#allocation3 + $0x20] sm:$0xff]
    %v223 = vld [vmem:[#allocation3 + $0x28] sm:$0xff]
    %v224 = vld [vmem:[#allocation3 + $0x30] sm:$0xff]
    %v225 = vld [vmem:[#allocation3 + $0x38] sm:$0xff]
    %v226 = vld [vmem:[#allocation3 + $0x40] sm:$0xff]
    %v227 = vld [vmem:[#allocation3 + $0x48] sm:$0xff]
    %v228 = vld [vmem:[#allocation3 + $0x50] sm:$0xff]
    %v229 = vld [vmem:[#allocation3 + $0x58] sm:$0xff]
    %v230 = vld [vmem:[#allocation3 + $0x60] sm:$0xff]
    %v231 = vld [vmem:[#allocation3 + $0x68] sm:$0xff]
    %v232 = vld [vmem:[#allocation3 + $0x70] sm:$0xff]
    %v233 = vld [vmem:[#allocation3 + $0x78] sm:$0xff]
    %v234 = vld [vmem:[#allocation3 + $0x80] sm:$0xff]
    %v235 = vld [vmem:[#allocation3 + $0x88] sm:$0xff]
    %v236 = vld [vmem:[#allocation3 + $0x90] sm:$0xff]
    %v237 = vld [vmem:[#allocation3 + $0x98] sm:$0xff]
    %v238 = vld [vmem:[#allocation3 + $0xa0] sm:$0xff]
    %v239 = vld [vmem:[#allocation3 + $0xa8] sm:$0xff]
    %v240 = vld [vmem:[#allocation3 + $0xb0] sm:$0xff]
    %v241 = vld [vmem:[#allocation3 + $0xb8] sm:$0xff]
    %v242 = vld [vmem:[#allocation3 + $0xc0] sm:$0xff]
    %v243 = vld [vmem:[#allocation3 + $0xc8] sm:$0xff]
    %v244 = vld [vmem:[#allocation3 + $0xd0] sm:$0xff]
    %v245 = vld [vmem:[#allocation3 + $0xd8] sm:$0xff]
    %v246 = vld [vmem:[#allocation3 + $0xe0] sm:$0xff]
    %v247 = vld [vmem:[#allocation3 + $0xe8] sm:$0xff]
    %v248 = vld [vmem:[#allocation3 + $0xf0] sm:$0xff]
    %v249 = vld [vmem:[#allocation3 + $0xf8] sm:$0xff]
    %v250 = vld [vmem:[%s2] sm:$0x3]
    %v252 = vperm.slane %v250, 0
    %v253 = vperm.slane %v250, 1
    %v288 = vunpack.c.l.b16 %v218
    %v289 = vunpack.c.h.b16 %v218
    %v290 = vunpack.c.l.b16 %v219
    %v291 = vunpack.c.h.b16 %v219
    %v292 = vunpack.c.l.b16 %v220
    %v293 = vunpack.c.h.b16 %v220
    %v294 = vunpack.c.l.b16 %v221
    %v295 = vunpack.c.h.b16 %v221
    %v296 = vunpack.c.l.b16 %v222
    %v297 = vunpack.c.h.b16 %v222
    %v298 = vunpack.c.l.b16 %v223
    %v299 = vunpack.c.h.b16 %v223
    %v300 = vunpack.c.l.b16 %v224
    %v301 = vunpack.c.h.b16 %v224
    %v302 = vunpack.c.l.b16 %v225
    %v303 = vunpack.c.h.b16 %v225
    %v304 = vunpack.c.l.b16 %v226
    %v305 = vunpack.c.h.b16 %v226
    %v306 = vunpack.c.l.b16 %v227
    %v307 = vunpack.c.h.b16 %v227
    %v308 = vunpack.c.l.b16 %v228
    %v309 = vunpack.c.h.b16 %v228
    %v310 = vunpack.c.l.b16 %v229
    %v311 = vunpack.c.h.b16 %v229
    %v312 = vunpack.c.l.b16 %v230
    %v313 = vunpack.c.h.b16 %v230
    %v314 = vunpack.c.l.b16 %v231
    %v315 = vunpack.c.h.b16 %v231
    %v316 = vunpack.c.l.b16 %v232
    %v317 = vunpack.c.h.b16 %v232
    %v318 = vunpack.c.l.b16 %v233
    %v319 = vunpack.c.h.b16 %v233
    %v320 = vunpack.c.l.b16 %v234
    %v321 = vunpack.c.h.b16 %v234
    %v322 = vunpack.c.l.b16 %v235
    %v323 = vunpack.c.h.b16 %v235
    %v324 = vunpack.c.l.b16 %v236
    %v325 = vunpack.c.h.b16 %v236
    %v326 = vunpack.c.l.b16 %v237
    %v327 = vunpack.c.h.b16 %v237
    %v328 = vunpack.c.l.b16 %v238
    %v329 = vunpack.c.h.b16 %v238
    %v330 = vunpack.c.l.b16 %v239
    %v331 = vunpack.c.h.b16 %v239
    %v332 = vunpack.c.l.b16 %v240
    %v333 = vunpack.c.h.b16 %v240
    %v334 = vunpack.c.l.b16 %v241
    %v335 = vunpack.c.h.b16 %v241
    %v336 = vunpack.c.l.b16 %v242
    %v337 = vunpack.c.h.b16 %v242
    %v338 = vunpack.c.l.b16 %v243
    %v339 = vunpack.c.h.b16 %v243
    %v340 = vunpack.c.l.b16 %v244
    %v341 = vunpack.c.h.b16 %v244
    %v342 = vunpack.c.l.b16 %v245
    %v343 = vunpack.c.h.b16 %v245
    %v344 = vunpack.c.l.b16 %v246
    %v345 = vunpack.c.h.b16 %v246
    %v346 = vunpack.c.l.b16 %v247
    %v347 = vunpack.c.h.b16 %v247
    %v348 = vunpack.c.l.b16 %v248
    %v349 = vunpack.c.h.b16 %v248
    %v350 = vunpack.c.l.b16 %v249
    %v351 = vunpack.c.h.b16 %v249
    %v352 = vpack.c.b16 %v290, %v288
    %v353 = vpack.c.b16 %v291, %v289
    %v354 = vpack.c.b16 %v294, %v292
    %v355 = vpack.c.b16 %v295, %v293
    %v356 = vpack.c.b16 %v298, %v296
    %v357 = vpack.c.b16 %v299, %v297
    %v358 = vpack.c.b16 %v302, %v300
    %v359 = vpack.c.b16 %v303, %v301
    %v360 = vpack.c.b16 %v306, %v304
    %v361 = vpack.c.b16 %v307, %v305
    %v362 = vpack.c.b16 %v310, %v308
    %v363 = vpack.c.b16 %v311, %v309
    %v364 = vpack.c.b16 %v314, %v312
    %v365 = vpack.c.b16 %v315, %v313
    %v366 = vpack.c.b16 %v318, %v316
    %v367 = vpack.c.b16 %v319, %v317
    %v368 = vpack.c.b16 %v322, %v320
    %v369 = vpack.c.b16 %v323, %v321
    %v370 = vpack.c.b16 %v326, %v324
    %v371 = vpack.c.b16 %v327, %v325
    %v372 = vpack.c.b16 %v330, %v328
    %v373 = vpack.c.b16 %v331, %v329
    %v374 = vpack.c.b16 %v334, %v332
    %v375 = vpack.c.b16 %v335, %v333
    %v376 = vpack.c.b16 %v338, %v336
    %v377 = vpack.c.b16 %v339, %v337
    %v378 = vpack.c.b16 %v342, %v340
    %v379 = vpack.c.b16 %v343, %v341
    %v380 = vpack.c.b16 %v346, %v344
    %v381 = vpack.c.b16 %v347, %v345
    %v382 = vpack.c.b16 %v350, %v348
    %v383 = vpack.c.b16 %v351, %v349
    %416 = vmatpush.bf16.msra.mxu0 %v366
    %417 = vmatpush.bf16.msra.mxu0 %v364
    %418 = vmatpush.bf16.msra.mxu0 %v362
    %419 = vmatpush.bf16.msra.mxu0 %v360
    %420 = vmatpush.bf16.msra.mxu0 %v358
    %421 = vmatpush.bf16.msra.mxu0 %v356
    %422 = vmatpush.bf16.msra.mxu0 %v354
    %423 = vmatpush.bf16.msra.mxu0 %v352
    %424 = vmatmul.bf16.gmra.mxu0 %v216
    %v425 = vpop.f32.mrf.mxu0
    %v426 = vadd.f32 %v252, %v425
    %v427 = vpop.f32.mrf.mxu0
    %v428 = vadd.f32 %v252, %v427
    %429 = vdwg.mxu0
    %430 = vmatpush.bf16.msra.mxu0 %v382
    %431 = vmatpush.bf16.msra.mxu0 %v380
    %432 = vmatpush.bf16.msra.mxu0 %v378
    %433 = vmatpush.bf16.msra.mxu0 %v376
    %434 = vmatpush.bf16.msra.mxu0 %v374
    %435 = vmatpush.bf16.msra.mxu0 %v372
    %436 = vmatpush.bf16.msra.mxu0 %v370
    %437 = vmatpush.bf16.msra.mxu0 %v368
    %438 = vmatmul.bf16.gmra.mxu0 %v217
    %v439 = vpop.f32.mrf.mxu0
    %v440 = vadd.f32 %v426, %v439
    %v441 = vpop.f32.mrf.mxu0
    %v442 = vadd.f32 %v428, %v441
    %443 = vdwg.mxu0
    %444 = vmatpush.bf16.msra.mxu0 %v367
    %445 = vmatpush.bf16.msra.mxu0 %v365
    %446 = vmatpush.bf16.msra.mxu0 %v363
    %447 = vmatpush.bf16.msra.mxu0 %v361
    %448 = vmatpush.bf16.msra.mxu0 %v359
    %449 = vmatpush.bf16.msra.mxu0 %v357
    %450 = vmatpush.bf16.msra.mxu0 %v355
    %451 = vmatpush.bf16.msra.mxu0 %v353
    %452 = vmatmul.bf16.gmra.mxu0 %v216
    %v453 = vpop.f32.mrf.mxu0
    %v454 = vadd.f32 %v253, %v453
    %v455 = vpop.f32.mrf.mxu0
    %v456 = vadd.f32 %v253, %v455
    %457 = vdwg.mxu0
    %458 = vmatpush.bf16.msra.mxu0 %v383
    %459 = vmatpush.bf16.msra.mxu0 %v381
    %460 = vmatpush.bf16.msra.mxu0 %v379
    %461 = vmatpush.bf16.msra.mxu0 %v377
    %462 = vmatpush.bf16.msra.mxu0 %v375
    %463 = vmatpush.bf16.msra.mxu0 %v373
    %464 = vmatpush.bf16.msra.mxu0 %v371
    %465 = vmatpush.bf16.msra.mxu0 %v369
    %466 = vmatmul.bf16.gmra.mxu0 %v217
    %v467 = vpop.f32.mrf.mxu0
    %v468 = vadd.f32 %v454, %v467
    %v469 = vpop.f32.mrf.mxu0
    %v470 = vadd.f32 %v456, %v469
    %471 = vdwg.mxu0
    %v472 = vmax.f32 %v440, 0.0
    %v473 = vmax.f32 %v468, 0.0
    %v474 = vmax.f32 %v442, 0.0
    %v475 = vmax.f32 %v470, 0.0
    %v476 = vmin.f32 %v472, 6.0
    %v477 = vmin.f32 %v473, 6.0
    %v478 = vmin.f32 %v474, 6.0
    %v479 = vmin.f32 %v475, 6.0
    %v480 = vpack.c.bf16 %v477, %v476
    %v481 = vpack.c.bf16 %v479, %v478
    %v482 = vld [vmem:[#allocation6] sm:$0xff]
    %v483 = vld [vmem:[#allocation6 + $0x8] sm:$0xff]
    %v484 = vld [vmem:[#allocation6 + $0x10] sm:$0xff]
    %v485 = vld [vmem:[#allocation6 + $0x18] sm:$0xff]
    %v486 = vld [vmem:[#allocation6 + $0x20] sm:$0xff]
    %v487 = vld [vmem:[#allocation6 + $0x28] sm:$0xff]
    %v488 = vld [vmem:[#allocation6 + $0x30] sm:$0xff]
    %v489 = vld [vmem:[#allocation6 + $0x38] sm:$0xff]
    %v490 = vld [vmem:[#allocation6 + $0x40] sm:$0xff]
    %v491 = vld [vmem:[#allocation6 + $0x48] sm:$0xff]
    %v492 = vld [vmem:[#allocation6 + $0x50] sm:$0xff]
    %v493 = vld [vmem:[#allocation6 + $0x58] sm:$0xff]
    %v494 = vld [vmem:[#allocation6 + $0x60] sm:$0xff]
    %v495 = vld [vmem:[#allocation6 + $0x68] sm:$0xff]
    %v496 = vld [vmem:[#allocation6 + $0x70] sm:$0xff]
    %v497 = vld [vmem:[#allocation6 + $0x78] sm:$0xff]
    %v498 = vld [vmem:[#allocation6 + $0x80] sm:$0xff]
    %v499 = vld [vmem:[#allocation6 + $0x88] sm:$0xff]
    %v500 = vld [vmem:[#allocation6 + $0x90] sm:$0xff]
    %v501 = vld [vmem:[#allocation6 + $0x98] sm:$0xff]
    %v502 = vld [vmem:[#allocation6 + $0xa0] sm:$0xff]
    %v503 = vld [vmem:[#allocation6 + $0xa8] sm:$0xff]
    %v504 = vld [vmem:[#allocation6 + $0xb0] sm:$0xff]
    %v505 = vld [vmem:[#allocation6 + $0xb8] sm:$0xff]
    %v506 = vld [vmem:[#allocation6 + $0xc0] sm:$0xff]
    %v507 = vld [vmem:[#allocation6 + $0xc8] sm:$0xff]
    %v508 = vld [vmem:[#allocation6 + $0xd0] sm:$0xff]
    %v509 = vld [vmem:[#allocation6 + $0xd8] sm:$0xff]
    %v510 = vld [vmem:[#allocation6 + $0xe0] sm:$0xff]
    %v511 = vld [vmem:[#allocation6 + $0xe8] sm:$0xff]
    %v512 = vld [vmem:[#allocation6 + $0xf0] sm:$0xff]
    %v513 = vld [vmem:[#allocation6 + $0xf8] sm:$0xff]
    %v514 = vld [vmem:[%s4] sm:$0x3]
    %v516 = vperm.slane %v514, 0
    %v517 = vperm.slane %v514, 1
    %v522 = vunpack.c.l.b16 %v480
    %v523 = vunpack.c.h.b16 %v480
    %v524 = vunpack.c.l.b16 %v481
    %v525 = vunpack.c.h.b16 %v481
    %v526 = vpack.c.b16 %v524, %v522
    %v527 = vpack.c.b16 %v525, %v523
    %v562 = vunpack.c.l.b16 %v482
    %v563 = vunpack.c.h.b16 %v482
    %v564 = vunpack.c.l.b16 %v483
    %v565 = vunpack.c.h.b16 %v483
    %v566 = vunpack.c.l.b16 %v484
    %v567 = vunpack.c.h.b16 %v484
    %v568 = vunpack.c.l.b16 %v485
    %v569 = vunpack.c.h.b16 %v485
    %v570 = vunpack.c.l.b16 %v486
    %v571 = vunpack.c.h.b16 %v486
    %v572 = vunpack.c.l.b16 %v487
    %v573 = vunpack.c.h.b16 %v487
    %v574 = vunpack.c.l.b16 %v488
    %v575 = vunpack.c.h.b16 %v488
    %v576 = vunpack.c.l.b16 %v489
    %v577 = vunpack.c.h.b16 %v489
    %v578 = vunpack.c.l.b16 %v490
    %v579 = vunpack.c.h.b16 %v490
    %v580 = vunpack.c.l.b16 %v491
    %v581 = vunpack.c.h.b16 %v491
    %v582 = vunpack.c.l.b16 %v492
    %v583 = vunpack.c.h.b16 %v492
    %v584 = vunpack.c.l.b16 %v493
    %v585 = vunpack.c.h.b16 %v493
    %v586 = vunpack.c.l.b16 %v494
    %v587 = vunpack.c.h.b16 %v494
    %v588 = vunpack.c.l.b16 %v495
    %v589 = vunpack.c.h.b16 %v495
    %v590 = vunpack.c.l.b16 %v496
    %v591 = vunpack.c.h.b16 %v496
    %v592 = vunpack.c.l.b16 %v497
    %v593 = vunpack.c.h.b16 %v497
    %v594 = vunpack.c.l.b16 %v498
    %v595 = vunpack.c.h.b16 %v498
    %v596 = vunpack.c.l.b16 %v499
    %v597 = vunpack.c.h.b16 %v499
    %v598 = vunpack.c.l.b16 %v500
    %v599 = vunpack.c.h.b16 %v500
    %v600 = vunpack.c.l.b16 %v501
    %v601 = vunpack.c.h.b16 %v501
    %v602 = vunpack.c.l.b16 %v502
    %v603 = vunpack.c.h.b16 %v502
    %v604 = vunpack.c.l.b16 %v503
    %v605 = vunpack.c.h.b16 %v503
    %v606 = vunpack.c.l.b16 %v504
    %v607 = vunpack.c.h.b16 %v504
    %v608 = vunpack.c.l.b16 %v505
    %v609 = vunpack.c.h.b16 %v505
    %v610 = vunpack.c.l.b16 %v506
    %v611 = vunpack.c.h.b16 %v506
    %v612 = vunpack.c.l.b16 %v507
    %v613 = vunpack.c.h.b16 %v507
    %v614 = vunpack.c.l.b16 %v508
    %v615 = vunpack.c.h.b16 %v508
    %v616 = vunpack.c.l.b16 %v509
    %v617 = vunpack.c.h.b16 %v509
    %v618 = vunpack.c.l.b16 %v510
    %v619 = vunpack.c.h.b16 %v510
    %v620 = vunpack.c.l.b16 %v511
    %v621 = vunpack.c.h.b16 %v511
    %v622 = vunpack.c.l.b16 %v512
    %v623 = vunpack.c.h.b16 %v512
    %v624 = vunpack.c.l.b16 %v513
    %v625 = vunpack.c.h.b16 %v513
    %v626 = vpack.c.b16 %v564, %v562
    %v627 = vpack.c.b16 %v565, %v563
    %v628 = vpack.c.b16 %v568, %v566
    %v629 = vpack.c.b16 %v569, %v567
    %v630 = vpack.c.b16 %v572, %v570
    %v631 = vpack.c.b16 %v573, %v571
    %v632 = vpack.c.b16 %v576, %v574
    %v633 = vpack.c.b16 %v577, %v575
    %v634 = vpack.c.b16 %v580, %v578
    %v635 = vpack.c.b16 %v581, %v579
    %v636 = vpack.c.b16 %v584, %v582
    %v637 = vpack.c.b16 %v585, %v583
    %v638 = vpack.c.b16 %v588, %v586
    %v639 = vpack.c.b16 %v589, %v587
    %v640 = vpack.c.b16 %v592, %v590
    %v641 = vpack.c.b16 %v593, %v591
    %v642 = vpack.c.b16 %v596, %v594
    %v643 = vpack.c.b16 %v597, %v595
    %v644 = vpack.c.b16 %v600, %v598
    %v645 = vpack.c.b16 %v601, %v599
    %v646 = vpack.c.b16 %v604, %v602
    %v647 = vpack.c.b16 %v605, %v603
    %v648 = vpack.c.b16 %v608, %v606
    %v649 = vpack.c.b16 %v609, %v607
    %v650 = vpack.c.b16 %v612, %v610
    %v651 = vpack.c.b16 %v613, %v611
    %v652 = vpack.c.b16 %v616, %v614
    %v653 = vpack.c.b16 %v617, %v615
    %v654 = vpack.c.b16 %v620, %v618
    %v655 = vpack.c.b16 %v621, %v619
    %v656 = vpack.c.b16 %v624, %v622
    %v657 = vpack.c.b16 %v625, %v623
    %690 = vmatpush.bf16.msra.mxu0 %v640
    %691 = vmatpush.bf16.msra.mxu0 %v638
    %692 = vmatpush.bf16.msra.mxu0 %v636
    %693 = vmatpush.bf16.msra.mxu0 %v634
    %694 = vmatpush.bf16.msra.mxu0 %v632
    %695 = vmatpush.bf16.msra.mxu0 %v630
    %696 = vmatpush.bf16.msra.mxu0 %v628
    %697 = vmatpush.bf16.msra.mxu0 %v626
    %698 = vmatmul.bf16.gmra.mxu0 %v526
    %v699 = vpop.f32.mrf.mxu0
    %v700 = vadd.f32 %v516, %v699
    %v701 = vpop.f32.mrf.mxu0
    %v702 = vadd.f32 %v516, %v701
    %703 = vdwg.mxu0
    %704 = vmatpush.bf16.msra.mxu0 %v656
    %705 = vmatpush.bf16.msra.mxu0 %v654
    %706 = vmatpush.bf16.msra.mxu0 %v652
    %707 = vmatpush.bf16.msra.mxu0 %v650
    %708 = vmatpush.bf16.msra.mxu0 %v648
    %709 = vmatpush.bf16.msra.mxu0 %v646
    %710 = vmatpush.bf16.msra.mxu0 %v644
    %711 = vmatpush.bf16.msra.mxu0 %v642
    %712 = vmatmul.bf16.gmra.mxu0 %v527
    %v713 = vpop.f32.mrf.mxu0
    %v714 = vadd.f32 %v700, %v713
    %v715 = vpop.f32.mrf.mxu0
    %v716 = vadd.f32 %v702, %v715
    %717 = vdwg.mxu0
    %718 = vmatpush.bf16.msra.mxu0 %v641
    %719 = vmatpush.bf16.msra.mxu0 %v639
    %720 = vmatpush.bf16.msra.mxu0 %v637
    %721 = vmatpush.bf16.msra.mxu0 %v635
    %722 = vmatpush.bf16.msra.mxu0 %v633
    %723 = vmatpush.bf16.msra.mxu0 %v631
    %724 = vmatpush.bf16.msra.mxu0 %v629
    %725 = vmatpush.bf16.msra.mxu0 %v627
    %726 = vmatmul.bf16.gmra.mxu0 %v526
    %v727 = vpop.f32.mrf.mxu0
    %v728 = vadd.f32 %v517, %v727
    %v729 = vpop.f32.mrf.mxu0
    %v730 = vadd.f32 %v517, %v729
    %731 = vdwg.mxu0
    %732 = vmatpush.bf16.msra.mxu0 %v657
    %733 = vmatpush.bf16.msra.mxu0 %v655
    %734 = vmatpush.bf16.msra.mxu0 %v653
    %735 = vmatpush.bf16.msra.mxu0 %v651
    %736 = vmatpush.bf16.msra.mxu0 %v649
    %737 = vmatpush.bf16.msra.mxu0 %v647
    %738 = vmatpush.bf16.msra.mxu0 %v645
    %739 = vmatpush.bf16.msra.mxu0 %v643
    %740 = vmatmul.bf16.gmra.mxu0 %v527
    %v741 = vpop.f32.mrf.mxu0
    %v742 = vadd.f32 %v728, %v741
    %v743 = vpop.f32.mrf.mxu0
    %v744 = vadd.f32 %v730, %v743
    %745 = vdwg.mxu0
    %v746 = vmax.f32 %v714, 0.0
    %v747 = vmax.f32 %v742, 0.0
    %v748 = vmax.f32 %v716, 0.0
    %v749 = vmax.f32 %v744, 0.0
    %v750 = vmin.f32 %v746, 6.0
    %v751 = vmin.f32 %v747, 6.0
    %v752 = vmin.f32 %v748, 6.0
    %v753 = vmin.f32 %v749, 6.0
    %v754 = vlaneseq
    %v755 = vshrl.u32 %v754, 7
    %v756 = vadd.s32 %v755, 8
    %vm757 = vcmp.lt.s32.totalorder %v755, 0
    %v758 = vsub.s32 0, %v755
    %v759 = vsel %vm757, %v758, %v755
    %v760 = vshrl.u32 %v759, 3
    %v761 = vand.u32 %v759, 7
    %v762 = vsub.s32 0, %v761
    %v763 = vsel %vm757, %v762, %v761
    %vm764 = vcmp.lt.s32.totalorder %v756, 0
    %v765 = vsub.s32 0, %v756
    %v766 = vsel %vm764, %v765, %v756
    %v767 = vshrl.u32 %v766, 3
    %v768 = vand.u32 %v766, 7
    %v769 = vsub.s32 0, %v768
    %v770 = vsel %vm764, %v769, %v768
    %vm771 = vcmp.ne.s32.totalorder %v763, 0
    %vm772 = vcmp.ne.s32.totalorder %v770, 0
    %vm773 = vcmp.lt.s32.totalorder %v763, 0
    %vm774 = vcmp.lt.s32.totalorder %v770, 0
    %vm775 = vmand %vm773, %vm771
    %vm776 = vmand %vm774, %vm772
    %v777 = vadd.s32 %v763, 8
    %v778 = vadd.s32 %v770, 8
    %v779 = vsel %vm775, %v777, %v763
    %v780 = vsel %vm776, %v778, %v770
    %v781 = vrot.slane %v750, 7
    %v782 = vrot.slane %v751, 7
    %v783 = vrot.slane %v752, 7
    %v784 = vrot.slane %v753, 7
    %vm785 = vcmp.lt.s32.totalorder %v755, 1
    %v786 = vsel %vm785, %v781, %v783
    %v787 = vsel %vm785, %v782, %v784
    %v788 = vsel %vm785, %v783, %v781
    %v789 = vsel %vm785, %v784, %v782
    %vm790 = vcmp.ge.s32.totalorder %v779, 1
    %vm791 = vcmp.ge.s32.totalorder %v780, 1
    %v792 = vsel %vm790, %v788, 0.0
    %v793 = vsel %vm790, %v789, 0.0
    %v794 = vsel %vm791, %v786, 0.0
    %v795 = vsel %vm791, %v787, 0.0
    %796 = vrot.lane.b32.xlu0 %v792, 32
    %v797 = vpop.permute.xlu0 %796
    %798 = vrot.lane.b32.xlu0 %v794, 32
    %v799 = vpop.permute.xlu0 %798
    %800 = vrot.lane.b32.xlu0 %v793, 32
    %v801 = vpop.permute.xlu0 %800
    %802 = vrot.lane.b32.xlu0 %v795, 32
    %v803 = vpop.permute.xlu0 %802
    %v804 = vlaneseq
    %v805 = vand.u32 %v804, 127
    %vm806 = vcmp.lt.s32.totalorder %v805, 32
    %v807 = vsel %vm806, %v797, %v801
    %v808 = vsel %vm806, %v799, %v803
    %v809 = vsel %vm806, %v801, %v797
    %v810 = vsel %vm806, %v803, %v799
    %v811 = vld [vmem:[#allocation8] sm:$0xff]
    %v812 = vld [vmem:[#allocation8 + $0x8] sm:$0xff]
    %v813 = vld [vmem:[#allocation8 + $0x10] sm:$0xff]
    %v814 = vld [vmem:[#allocation8 + $0x18] sm:$0xff]
    %v815 = vmul.f32 %v809, %v811
    %v816 = vmul.f32 %v807, %v812
    %v817 = vmul.f32 %v810, %v813
    %v818 = vmul.f32 %v808, %v814
    %v819 = vadd.f32 %v815, 0.0
    %v820 = vadd.f32 %v816, 0.0
    %v821 = vadd.f32 %v817, 0.0
    %v822 = vadd.f32 %v818, 0.0
    %s823 = scalar_lea.vmem [#allocation8], 32
    %v824 = vld [vmem:[%s823] sm:$0xff]
    %v825 = vld [vmem:[%s823 + $0x8] sm:$0xff]
    %v826 = vld [vmem:[%s823 + $0x10] sm:$0xff]
    %v827 = vld [vmem:[%s823 + $0x18] sm:$0xff]
    %v828 = vmul.f32 %v792, %v824
    %v829 = vmul.f32 %v793, %v825
    %v830 = vmul.f32 %v794, %v826
    %v831 = vmul.f32 %v795, %v827
    %v832 = vadd.f32 %v819, %v828
    %v833 = vadd.f32 %v820, %v829
    %v834 = vadd.f32 %v821, %v830
    %v835 = vadd.f32 %v822, %v831
    %836 = vrot.lane.b32.xlu0 %v792, 96
    %v837 = vpop.permute.xlu0 %836
    %838 = vrot.lane.b32.xlu0 %v794, 96
    %v839 = vpop.permute.xlu0 %838
    %840 = vrot.lane.b32.xlu0 %v793, 96
    %v841 = vpop.permute.xlu0 %840
    %842 = vrot.lane.b32.xlu0 %v795, 96
    %v843 = vpop.permute.xlu0 %842
    %vm844 = vcmp.lt.s32.totalorder %v805, 96
    %v845 = vsel %vm844, %v837, %v841
    %v846 = vsel %vm844, %v839, %v843
    %v847 = vsel %vm844, %v841, %v837
    %v848 = vsel %vm844, %v843, %v839
    %s849 = scalar_lea.vmem [#allocation8], 64
    %v850 = vld [vmem:[%s849] sm:$0xff]
    %v851 = vld [vmem:[%s849 + $0x8] sm:$0xff]
    %v852 = vld [vmem:[%s849 + $0x10] sm:$0xff]
    %v853 = vld [vmem:[%s849 + $0x18] sm:$0xff]
    %v854 = vmul.f32 %v845, %v850
    %v855 = vmul.f32 %v847, %v851
    %v856 = vmul.f32 %v846, %v852
    %v857 = vmul.f32 %v848, %v853
    %v858 = vadd.f32 %v832, %v854
    %v859 = vadd.f32 %v833, %v855
    %v860 = vadd.f32 %v834, %v856
    %v861 = vadd.f32 %v835, %v857
    %862 = vrot.lane.b32.xlu0 %v750, 32
    %v863 = vpop.permute.xlu0 %862
    %864 = vrot.lane.b32.xlu0 %v752, 32
    %v865 = vpop.permute.xlu0 %864
    %866 = vrot.lane.b32.xlu0 %v751, 32
    %v867 = vpop.permute.xlu0 %866
    %868 = vrot.lane.b32.xlu0 %v753, 32
    %v869 = vpop.permute.xlu0 %868
    %v870 = vsel %vm806, %v863, %v867
    %v871 = vsel %vm806, %v865, %v869
    %v872 = vsel %vm806, %v867, %v863
    %v873 = vsel %vm806, %v869, %v865
    %s874 = scalar_lea.vmem [#allocation8], 96
    %v875 = vld [vmem:[%s874] sm:$0xff]
    %v876 = vld [vmem:[%s874 + $0x8] sm:$0xff]
    %v877 = vld [vmem:[%s874 + $0x10] sm:$0xff]
    %v878 = vld [vmem:[%s874 + $0x18] sm:$0xff]
    %v879 = vmul.f32 %v872, %v875
    %v880 = vmul.f32 %v870, %v876
    %v881 = vmul.f32 %v873, %v877
    %v882 = vmul.f32 %v871, %v878
    %v883 = vadd.f32 %v858, %v879
    %v884 = vadd.f32 %v859, %v880
    %v885 = vadd.f32 %v860, %v881
    %v886 = vadd.f32 %v861, %v882
    %s887 = scalar_lea.vmem [#allocation8], 128
    %v888 = vld [vmem:[%s887] sm:$0xff]
    %v889 = vld [vmem:[%s887 + $0x8] sm:$0xff]
    %v890 = vld [vmem:[%s887 + $0x10] sm:$0xff]
    %v891 = vld [vmem:[%s887 + $0x18] sm:$0xff]
    %v892 = vmul.f32 %v750, %v888
    %v893 = vmul.f32 %v751, %v889
    %v894 = vmul.f32 %v752, %v890
    %v895 = vmul.f32 %v753, %v891
    %v896 = vadd.f32 %v883, %v892
    %v897 = vadd.f32 %v884, %v893
    %v898 = vadd.f32 %v885, %v894
    %v899 = vadd.f32 %v886, %v895
    %900 = vrot.lane.b32.xlu0 %v750, 96
    %v901 = vpop.permute.xlu0 %900
    %902 = vrot.lane.b32.xlu0 %v752, 96
    %v903 = vpop.permute.xlu0 %902
    %904 = vrot.lane.b32.xlu0 %v751, 96
    %v905 = vpop.permute.xlu0 %904
    %906 = vrot.lane.b32.xlu0 %v753, 96
    %v907 = vpop.permute.xlu0 %906
    %v908 = vsel %vm844, %v901, %v905
    %v909 = vsel %vm844, %v903, %v907
    %v910 = vsel %vm844, %v905, %v901
    %v911 = vsel %vm844, %v907, %v903
    %s912 = scalar_lea.vmem [#allocation8], 160
    %v913 = vld [vmem:[%s912] sm:$0xff]
    %v914 = vld [vmem:[%s912 + $0x8] sm:$0xff]
    %v915 = vld [vmem:[%s912 + $0x10] sm:$0xff]
    %v916 = vld [vmem:[%s912 + $0x18] sm:$0xff]
    %v917 = vmul.f32 %v908, %v913
    %v918 = vmul.f32 %v910, %v914
    %v919 = vmul.f32 %v909, %v915
    %v920 = vmul.f32 %v911, %v916
    %v921 = vadd.f32 %v896, %v917
    %v922 = vadd.f32 %v897, %v918
    %v923 = vadd.f32 %v898, %v919
    %v924 = vadd.f32 %v899, %v920
    %v925 = vrot.slane %v750, 1
    %v926 = vrot.slane %v751, 1
    %v927 = vrot.slane %v752, 1
    %v928 = vrot.slane %v753, 1
    %vm929 = vcmp.lt.s32.totalorder %v755, 7
    %v930 = vsel %vm929, %v925, %v927
    %v931 = vsel %vm929, %v926, %v928
    %v932 = vsel %vm929, %v927, %v925
    %v933 = vsel %vm929, %v928, %v926
    %vm934 = vcmp.lt.s32.totalorder %v779, 7
    %vm935 = vcmp.lt.s32.totalorder %v780, 7
    %v936 = vsel %vm934, %v930, 0.0
    %v937 = vsel %vm934, %v931, 0.0
    %v938 = vsel %vm935, %v932, 0.0
    %v939 = vsel %vm935, %v933, 0.0
    %940 = vrot.lane.b32.xlu0 %v936, 32
    %v941 = vpop.permute.xlu0 %940
    %942 = vrot.lane.b32.xlu0 %v938, 32
    %v943 = vpop.permute.xlu0 %942
    %944 = vrot.lane.b32.xlu0 %v937, 32
    %v945 = vpop.permute.xlu0 %944
    %946 = vrot.lane.b32.xlu0 %v939, 32
    %v947 = vpop.permute.xlu0 %946
    %v948 = vsel %vm806, %v941, %v945
    %v949 = vsel %vm806, %v943, %v947
    %v950 = vsel %vm806, %v945, %v941
    %v951 = vsel %vm806, %v947, %v943
    %s952 = scalar_lea.vmem [#allocation8], 192
    %v953 = vld [vmem:[%s952] sm:$0xff]
    %v954 = vld [vmem:[%s952 + $0x8] sm:$0xff]
    %v955 = vld [vmem:[%s952 + $0x10] sm:$0xff]
    %v956 = vld [vmem:[%s952 + $0x18] sm:$0xff]
    %v957 = vmul.f32 %v950, %v953
    %v958 = vmul.f32 %v948, %v954
    %v959 = vmul.f32 %v951, %v955
    %v960 = vmul.f32 %v949, %v956
    %v961 = vadd.f32 %v921, %v957
    %v962 = vadd.f32 %v922, %v958
    %v963 = vadd.f32 %v923, %v959
    %v964 = vadd.f32 %v924, %v960
    %s965 = scalar_lea.vmem [#allocation8], 224
    %v966 = vld [vmem:[%s965] sm:$0xff]
    %v967 = vld [vmem:[%s965 + $0x8] sm:$0xff]
    %v968 = vld [vmem:[%s965 + $0x10] sm:$0xff]
    %v969 = vld [vmem:[%s965 + $0x18] sm:$0xff]
    %v970 = vmul.f32 %v936, %v966
    %v971 = vmul.f32 %v937, %v967
    %v972 = vmul.f32 %v938, %v968
    %v973 = vmul.f32 %v939, %v969
    %v974 = vadd.f32 %v961, %v970
    %v975 = vadd.f32 %v962, %v971
    %v976 = vadd.f32 %v963, %v972
    %v977 = vadd.f32 %v964, %v973
    %978 = vrot.lane.b32.xlu0 %v936, 96
    %v979 = vpop.permute.xlu0 %978
    %980 = vrot.lane.b32.xlu0 %v938, 96
    %v981 = vpop.permute.xlu0 %980
    %982 = vrot.lane.b32.xlu0 %v937, 96
    %v983 = vpop.permute.xlu0 %982
    %984 = vrot.lane.b32.xlu0 %v939, 96
    %v985 = vpop.permute.xlu0 %984
    %v986 = vsel %vm844, %v979, %v983
    %v987 = vsel %vm844, %v981, %v985
    %v988 = vsel %vm844, %v983, %v979
    %v989 = vsel %vm844, %v985, %v981
    %s990 = scalar_lea.vmem [#allocation8], 256
    %v991 = vld [vmem:[%s990] sm:$0xff]
    %v992 = vld [vmem:[%s990 + $0x8] sm:$0xff]
    %v993 = vld [vmem:[%s990 + $0x10] sm:$0xff]
    %v994 = vld [vmem:[%s990 + $0x18] sm:$0xff]
    %v995 = vmul.f32 %v986, %v991
    %v996 = vmul.f32 %v988, %v992
    %v997 = vmul.f32 %v987, %v993
    %v998 = vmul.f32 %v989, %v994
    %v999 = vadd.f32 %v974, %v995
    %v1000 = vadd.f32 %v975, %v996
    %v1001 = vadd.f32 %v976, %v997
    %v1002 = vadd.f32 %v977, %v998
    %v1003 = vld [vmem:[%s6] sm:$0x3]
    %v1005 = vperm.slane %v1003, 0
    %v1006 = vperm.slane %v1003, 1
    %v1009 = vadd.f32 %v999, %v1005
    %v1010 = vadd.f32 %v1000, %v1006
    %v1011 = vadd.f32 %v1001, %v1005
    %v1012 = vadd.f32 %v1002, %v1006
    %v1013 = vmax.f32 %v1009, 0.0
    %v1014 = vmax.f32 %v1010, 0.0
    %v1015 = vmax.f32 %v1011, 0.0
    %v1016 = vmax.f32 %v1012, 0.0
    %v1017 = vpack.c.bf16 %v1014, %v1013
    %v1018 = vpack.c.bf16 %v1016, %v1015
    %v1021 = vunpack.c.l.b16 %v1017
    %v1022 = vunpack.c.h.b16 %v1017
    %v1023 = vunpack.c.l.b16 %v1018
    %v1024 = vunpack.c.h.b16 %v1018
    %v1025 = vpack.c.b16 %v1023, %v1021
    %v1026 = vpack.c.b16 %v1024, %v1022
    %v1029 = vld [vmem:[#allocation9] sm:$0xf]
    %v1030 = vld [vmem:[#allocation9 + $0x4] sm:$0xf]
    %v1031 = vld [vmem:[#allocation9 + $0x8] sm:$0xf]
    %v1032 = vld [vmem:[#allocation9 + $0xc] sm:$0xf]
    %v1033 = vld [vmem:[#allocation9 + $0x10] sm:$0xf]
    %v1034 = vld [vmem:[#allocation9 + $0x14] sm:$0xf]
    %v1035 = vld [vmem:[#allocation9 + $0x18] sm:$0xf]
    %v1036 = vld [vmem:[#allocation9 + $0x1c] sm:$0xf]
    %v1037 = vld [vmem:[#allocation9 + $0x20] sm:$0xf]
    %v1038 = vld [vmem:[#allocation9 + $0x24] sm:$0xf]
    %v1039 = vld [vmem:[#allocation9 + $0x28] sm:$0xf]
    %v1040 = vld [vmem:[#allocation9 + $0x2c] sm:$0xf]
    %v1041 = vld [vmem:[#allocation9 + $0x30] sm:$0xf]
    %v1042 = vld [vmem:[#allocation9 + $0x34] sm:$0xf]
    %v1043 = vld [vmem:[#allocation9 + $0x38] sm:$0xf]
    %v1044 = vld [vmem:[#allocation9 + $0x3c] sm:$0xf]
    %v1045 = vld [vmem:[#allocation9 + $0x40] sm:$0xf]
    %v1046 = vld [vmem:[#allocation9 + $0x44] sm:$0xf]
    %v1047 = vld [vmem:[#allocation9 + $0x48] sm:$0xf]
    %v1048 = vld [vmem:[#allocation9 + $0x4c] sm:$0xf]
    %v1049 = vld [vmem:[#allocation9 + $0x50] sm:$0xf]
    %v1050 = vld [vmem:[#allocation9 + $0x54] sm:$0xf]
    %v1051 = vld [vmem:[#allocation9 + $0x58] sm:$0xf]
    %v1052 = vld [vmem:[#allocation9 + $0x5c] sm:$0xf]
    %v1053 = vld [vmem:[#allocation9 + $0x60] sm:$0xf]
    %v1054 = vld [vmem:[#allocation9 + $0x64] sm:$0xf]
    %v1055 = vld [vmem:[#allocation9 + $0x68] sm:$0xf]
    %v1056 = vld [vmem:[#allocation9 + $0x6c] sm:$0xf]
    %v1057 = vld [vmem:[#allocation9 + $0x70] sm:$0xf]
    %v1058 = vld [vmem:[#allocation9 + $0x74] sm:$0xf]
    %v1059 = vld [vmem:[#allocation9 + $0x78] sm:$0xf]
    %v1060 = vld [vmem:[#allocation9 + $0x7c] sm:$0xf]
    %v1061 = vld [vmem:[#allocation9 + $0x80] sm:$0xf]
    %v1062 = vld [vmem:[#allocation9 + $0x84] sm:$0xf]
    %v1063 = vld [vmem:[#allocation9 + $0x88] sm:$0xf]
    %v1064 = vld [vmem:[#allocation9 + $0x8c] sm:$0xf]
    %v1065 = vld [vmem:[#allocation9 + $0x90] sm:$0xf]
    %v1066 = vld [vmem:[#allocation9 + $0x94] sm:$0xf]
    %v1067 = vld [vmem:[#allocation9 + $0x98] sm:$0xf]
    %v1068 = vld [vmem:[#allocation9 + $0x9c] sm:$0xf]
    %v1069 = vld [vmem:[#allocation9 + $0xa0] sm:$0xf]
    %v1070 = vld [vmem:[#allocation9 + $0xa4] sm:$0xf]
    %v1071 = vld [vmem:[#allocation9 + $0xa8] sm:$0xf]
    %v1072 = vld [vmem:[#allocation9 + $0xac] sm:$0xf]
    %v1073 = vld [vmem:[#allocation9 + $0xb0] sm:$0xf]
    %v1074 = vld [vmem:[#allocation9 + $0xb4] sm:$0xf]
    %v1075 = vld [vmem:[#allocation9 + $0xb8] sm:$0xf]
    %v1076 = vld [vmem:[#allocation9 + $0xbc] sm:$0xf]
    %v1077 = vld [vmem:[#allocation9 + $0xc0] sm:$0xf]
    %v1078 = vld [vmem:[#allocation9 + $0xc4] sm:$0xf]
    %v1079 = vld [vmem:[#allocation9 + $0xc8] sm:$0xf]
    %v1080 = vld [vmem:[#allocation9 + $0xcc] sm:$0xf]
    %v1081 = vld [vmem:[#allocation9 + $0xd0] sm:$0xf]
    %v1082 = vld [vmem:[#allocation9 + $0xd4] sm:$0xf]
    %v1083 = vld [vmem:[#allocation9 + $0xd8] sm:$0xf]
    %v1084 = vld [vmem:[#allocation9 + $0xdc] sm:$0xf]
    %v1085 = vld [vmem:[#allocation9 + $0xe0] sm:$0xf]
    %v1086 = vld [vmem:[#allocation9 + $0xe4] sm:$0xf]
    %v1087 = vld [vmem:[#allocation9 + $0xe8] sm:$0xf]
    %v1088 = vld [vmem:[#allocation9 + $0xec] sm:$0xf]
    %v1089 = vld [vmem:[#allocation9 + $0xf0] sm:$0xf]
    %v1090 = vld [vmem:[#allocation9 + $0xf4] sm:$0xf]
    %v1091 = vld [vmem:[#allocation9 + $0xf8] sm:$0xf]
    %v1092 = vld [vmem:[#allocation9 + $0xfc] sm:$0xf]
    %v1093 = vld [vmem:[%s8] sm:$0x1]
    %v1095 = vperm.slane %v1093, 0
    %v1161 = vunpack.c.l.b16 %v1029
    %v1162 = vunpack.c.l.b16 %v1030
    %v1163 = vunpack.c.l.b16 %v1031
    %v1164 = vunpack.c.l.b16 %v1032
    %v1165 = vunpack.c.l.b16 %v1033
    %v1166 = vunpack.c.l.b16 %v1034
    %v1167 = vunpack.c.l.b16 %v1035
    %v1168 = vunpack.c.l.b16 %v1036
    %v1169 = vunpack.c.l.b16 %v1037
    %v1170 = vunpack.c.l.b16 %v1038
    %v1171 = vunpack.c.l.b16 %v1039
    %v1172 = vunpack.c.l.b16 %v1040
    %v1173 = vunpack.c.l.b16 %v1041
    %v1174 = vunpack.c.l.b16 %v1042
    %v1175 = vunpack.c.l.b16 %v1043
    %v1176 = vunpack.c.l.b16 %v1044
    %v1177 = vunpack.c.l.b16 %v1045
    %v1178 = vunpack.c.l.b16 %v1046
    %v1179 = vunpack.c.l.b16 %v1047
    %v1180 = vunpack.c.l.b16 %v1048
    %v1181 = vunpack.c.l.b16 %v1049
    %v1182 = vunpack.c.l.b16 %v1050
    %v1183 = vunpack.c.l.b16 %v1051
    %v1184 = vunpack.c.l.b16 %v1052
    %v1185 = vunpack.c.l.b16 %v1053
    %v1186 = vunpack.c.l.b16 %v1054
    %v1187 = vunpack.c.l.b16 %v1055
    %v1188 = vunpack.c.l.b16 %v1056
    %v1189 = vunpack.c.l.b16 %v1057
    %v1190 = vunpack.c.l.b16 %v1058
    %v1191 = vunpack.c.l.b16 %v1059
    %v1192 = vunpack.c.l.b16 %v1060
    %v1193 = vunpack.c.l.b16 %v1061
    %v1194 = vunpack.c.l.b16 %v1062
    %v1195 = vunpack.c.l.b16 %v1063
    %v1196 = vunpack.c.l.b16 %v1064
    %v1197 = vunpack.c.l.b16 %v1065
    %v1198 = vunpack.c.l.b16 %v1066
    %v1199 = vunpack.c.l.b16 %v1067
    %v1200 = vunpack.c.l.b16 %v1068
    %v1201 = vunpack.c.l.b16 %v1069
    %v1202 = vunpack.c.l.b16 %v1070
    %v1203 = vunpack.c.l.b16 %v1071
    %v1204 = vunpack.c.l.b16 %v1072
    %v1205 = vunpack.c.l.b16 %v1073
    %v1206 = vunpack.c.l.b16 %v1074
    %v1207 = vunpack.c.l.b16 %v1075
    %v1208 = vunpack.c.l.b16 %v1076
    %v1209 = vunpack.c.l.b16 %v1077
    %v1210 = vunpack.c.l.b16 %v1078
    %v1211 = vunpack.c.l.b16 %v1079
    %v1212 = vunpack.c.l.b16 %v1080
    %v1213 = vunpack.c.l.b16 %v1081
    %v1214 = vunpack.c.l.b16 %v1082
    %v1215 = vunpack.c.l.b16 %v1083
    %v1216 = vunpack.c.l.b16 %v1084
    %v1217 = vunpack.c.l.b16 %v1085
    %v1218 = vunpack.c.l.b16 %v1086
    %v1219 = vunpack.c.l.b16 %v1087
    %v1220 = vunpack.c.l.b16 %v1088
    %v1221 = vunpack.c.l.b16 %v1089
    %v1222 = vunpack.c.l.b16 %v1090
    %v1223 = vunpack.c.l.b16 %v1091
    %v1224 = vunpack.c.l.b16 %v1092
    %v1225 = vpack.c.b16 %v1162, %v1161
    %v1226 = vpack.c.b16 %v1164, %v1163
    %v1227 = vpack.c.b16 %v1166, %v1165
    %v1228 = vpack.c.b16 %v1168, %v1167
    %v1229 = vpack.c.b16 %v1170, %v1169
    %v1230 = vpack.c.b16 %v1172, %v1171
    %v1231 = vpack.c.b16 %v1174, %v1173
    %v1232 = vpack.c.b16 %v1176, %v1175
    %v1233 = vpack.c.b16 %v1178, %v1177
    %v1234 = vpack.c.b16 %v1180, %v1179
    %v1235 = vpack.c.b16 %v1182, %v1181
    %v1236 = vpack.c.b16 %v1184, %v1183
    %v1237 = vpack.c.b16 %v1186, %v1185
    %v1238 = vpack.c.b16 %v1188, %v1187
    %v1239 = vpack.c.b16 %v1190, %v1189
    %v1240 = vpack.c.b16 %v1192, %v1191
    %v1241 = vpack.c.b16 %v1194, %v1193
    %v1242 = vpack.c.b16 %v1196, %v1195
    %v1243 = vpack.c.b16 %v1198, %v1197
    %v1244 = vpack.c.b16 %v1200, %v1199
    %v1245 = vpack.c.b16 %v1202, %v1201
    %v1246 = vpack.c.b16 %v1204, %v1203
    %v1247 = vpack.c.b16 %v1206, %v1205
    %v1248 = vpack.c.b16 %v1208, %v1207
    %v1249 = vpack.c.b16 %v1210, %v1209
    %v1250 = vpack.c.b16 %v1212, %v1211
    %v1251 = vpack.c.b16 %v1214, %v1213
    %v1252 = vpack.c.b16 %v1216, %v1215
    %v1253 = vpack.c.b16 %v1218, %v1217
    %v1254 = vpack.c.b16 %v1220, %v1219
    %v1255 = vpack.c.b16 %v1222, %v1221
    %v1256 = vpack.c.b16 %v1224, %v1223
    %1289 = vmatpush.bf16.msra.mxu0 %v1232
    %1290 = vmatpush.bf16.msra.mxu0 %v1231
    %1291 = vmatpush.bf16.msra.mxu0 %v1230
    %1292 = vmatpush.bf16.msra.mxu0 %v1229
    %1293 = vmatpush.bf16.msra.mxu0 %v1228
    %1294 = vmatpush.bf16.msra.mxu0 %v1227
    %1295 = vmatpush.bf16.msra.mxu0 %v1226
    %1296 = vmatpush.bf16.msra.mxu0 %v1225
    %1297 = vmatmul.bf16.gmra.mxu0 %v1025
    %v1298 = vpop.f32.mrf.mxu0
    %v1299 = vadd.f32 %v1095, %v1298
    %v1300 = vpop.f32.mrf.mxu0
    %v1301 = vadd.f32 %v1095, %v1300
    %1302 = vdwg.mxu0
    %1303 = vmatpush.bf16.msra.mxu0 %v1240
    %1304 = vmatpush.bf16.msra.mxu0 %v1239
    %1305 = vmatpush.bf16.msra.mxu0 %v1238
    %1306 = vmatpush.bf16.msra.mxu0 %v1237
    %1307 = vmatpush.bf16.msra.mxu0 %v1236
    %1308 = vmatpush.bf16.msra.mxu0 %v1235
    %1309 = vmatpush.bf16.msra.mxu0 %v1234
    %1310 = vmatpush.bf16.msra.mxu0 %v1233
    %1311 = vmatmul.bf16.gmra.mxu0 %v1026
    %v1312 = vpop.f32.mrf.mxu0
    %v1313 = vadd.f32 %v1299, %v1312
    %v1314 = vpop.f32.mrf.mxu0
    %v1315 = vadd.f32 %v1301, %v1314
    %1316 = vdwg.mxu0
    %1317 = vmatpush.bf16.msra.mxu0 %v1248
    %1318 = vmatpush.bf16.msra.mxu0 %v1247
    %1319 = vmatpush.bf16.msra.mxu0 %v1246
    %1320 = vmatpush.bf16.msra.mxu0 %v1245
    %1321 = vmatpush.bf16.msra.mxu0 %v1244
    %1322 = vmatpush.bf16.msra.mxu0 %v1243
    %1323 = vmatpush.bf16.msra.mxu0 %v1242
    %1324 = vmatpush.bf16.msra.mxu0 %v1241
    %1325 = vmatmul.bf16.gmra.mxu0 %v526
    %v1326 = vpop.f32.mrf.mxu0
    %v1327 = vadd.f32 %v1313, %v1326
    %v1328 = vpop.f32.mrf.mxu0
    %v1329 = vadd.f32 %v1315, %v1328
    %1330 = vdwg.mxu0
    %1331 = vmatpush.bf16.msra.mxu0 %v1256
    %1332 = vmatpush.bf16.msra.mxu0 %v1255
    %1333 = vmatpush.bf16.msra.mxu0 %v1254
    %1334 = vmatpush.bf16.msra.mxu0 %v1253
    %1335 = vmatpush.bf16.msra.mxu0 %v1252
    %1336 = vmatpush.bf16.msra.mxu0 %v1251
    %1337 = vmatpush.bf16.msra.mxu0 %v1250
    %1338 = vmatpush.bf16.msra.mxu0 %v1249
    %1339 = vmatmul.bf16.gmra.mxu0 %v527
    %v1340 = vpop.f32.mrf.mxu0
    %v1341 = vadd.f32 %v1327, %v1340
    %v1342 = vpop.f32.mrf.mxu0
    %v1343 = vadd.f32 %v1329, %v1342
    %1344 = vdwg.mxu0
    %1345 = vst [vmem:[#allocation11] sm:$0xff] %v1341
    %1346 = vst [vmem:[#allocation11 + $0x8] sm:$0xff] %v1343
    // Predicated region
    $region54: #{tpu_custom_call.1} parent=1 // pred_check
      _
    $region55: #{tpu_custom_call.1} parent=1 // pred_check_branch
      %1348 = sbr.rel (0) target = $region57
    $region56: #{tpu_custom_call.1} parent=1 // pred_region
      %1350 = vsyncadd [#allocation5], 0
      %s1351 = sshll.u32 [#allocation11], 4
      %s1352 = int_to_ptr.vmem [resolvable:$true] %s1351
      %s1353 = sshll.u32 %s9, 4
      %s1354 = int_to_ptr.hbm [resolvable:$true] %s1353
      %1359 = dma.vmem_to_hbm [thread:$0]  %s1352, 256, %s1354, [#allocation5], 128, 128, 8
    $region57: #{tpu_custom_call.1} parent=1 // pred_fallthru
      _
    // Predicated region
    $region58: #{tpu_custom_call.1} parent=1 // pred_check
      _
    $region59: #{tpu_custom_call.1} parent=1 // pred_check_branch
      %1361 = sbr.rel (0) target = $region61
    $region60: #{tpu_custom_call.1} parent=1 // pred_region
      %1363 = dma.done [#allocation5], 256
    $region61: #{tpu_custom_call.1} parent=1 // pred_fallthru
      _
    %1364 = vsyncpa [#allocation4], 1
    %1365 = vsyncpa [#allocation7], 1
    %1366 = vsyncpa [#allocation10], 1
    %1367 = vsyncpa [#allocation5], 1

</llo_original>
